<compile_context>
chip_gen: v7x
topology: tpu7x:2x2x1
jax: 0.10.0
libtpu: 0.0.40
codegen_flags: <defaults>
</compile_context>

<pallas_src>
import functools
import math

import jax
import jax.numpy as jnp
from jax import lax
from jax.experimental import pallas as pl
from jax.experimental.pallas import tpu as pltpu

_SUBLANE = 8
_LANES = 128


def _round_up(x, m):
    return ((x + m - 1) // m) * m


def _gelu_exact(x):
    # PyTorch nn.GELU() default: 0.5 * x * (1 + erf(x / sqrt(2)))
    return 0.5 * x * (1.0 + lax.erf(x * 0.7071067811865475))


# --------------------------- hardware detection -----------------------------

def _tpu_generation():
    try:
        kind = jax.devices()[0].device_kind.lower().replace(" ", "")
    except Exception:
        return 6  # conservative default
    for g in (7, 6, 5, 4, 3):
        if (f"v{g}" in kind) or (f"tpu{g}" in kind):
            return g
    return 6


def _default_pack_width(gen):
    # v5e MXU is 128 wide -> Dp=128 keeps a single K-pass and 4x less weight VMEM.
    return 128 if gen <= 5 else 256


def _num_tensorcores(gen):
    return 2 if gen >= 7 else 1


def _vmem_capacity_bytes(gen):
    try:
        info = pltpu.get_tpu_info()
        cap = getattr(info, "vmem_capacity_bytes", None)
        if cap:
            return int(cap)
    except Exception:
        pass
    return (64 << 20) if gen >= 7 else (128 << 20)


# --------------------------------- kernel -----------------------------------

def _mlp_kernel(num_layer, matmul_dtype, approx_gelu, z_ref, w_ref, b_ref, o_ref):
    # z_ref: (TB, Dp) f32   w_ref: (L, Dp, Dp) matmul_dtype   b_ref: (L, 1, Dp) f32
    x = z_ref[...].astype(jnp.float32)
    gelu = (lambda v: jax.nn.gelu(v, approximate=True)) if approx_gelu else _gelu_exact

    if num_layer <= 8:
        # Static unroll for small L (typical for this module).
        for l in range(num_layer):
            x = jnp.dot(x.astype(matmul_dtype), w_ref[l],
                        preferred_element_type=jnp.float32) + b_ref[l]
            if l < num_layer - 1:
                x = gelu(x)
    else:
        # Large L: rolled loop bounds code size / live ranges.
        def body(l, v):
            y = jnp.dot(v.astype(matmul_dtype), w_ref[l],
                        preferred_element_type=jnp.float32) + b_ref[l]
            return gelu(y)
        x = lax.fori_loop(0, num_layer - 1, body, x)
        x = jnp.dot(x.astype(matmul_dtype), w_ref[num_layer - 1],
                    preferred_element_type=jnp.float32) + b_ref[num_layer - 1]

    o_ref[...] = x.astype(o_ref.dtype)


# ------------------------------ param packing -------------------------------

def _pack_params(weights, biases, pack_width, matmul_dtype):
    """PyTorch nn.Linear (out,in) weights -> lane-packed block-diagonal layout."""
    L, D, _ = weights.shape
    w_t = jnp.transpose(weights, (0, 2, 1)).astype(jnp.float32)  # (L, in, out)
    b = biases.astype(jnp.float32)

    if D < pack_width and pack_width % D == 0:
        P, D_eff = pack_width // D, D
    else:
        # Lane-dense fallback: pad the feature dim to a multiple of 128 so we
        # never emit masked (lane-sparse) stores.
        P, D_eff = 1, _round_up(D, _LANES)

    if D_eff != D:
        w_t = jnp.zeros((L, D_eff, D_eff), jnp.float32).at[:, :D, :D].set(w_t)
        b = jnp.zeros((L, D_eff), jnp.float32).at[:, :D].set(b)

    Dp = P * D_eff
    if P > 1:
        eye_p = jnp.eye(P, dtype=jnp.float32)
        w_packed = jnp.einsum("pq,lij->lpiqj", eye_p, w_t).reshape(L, Dp, Dp)
        b_packed = jnp.tile(b.reshape(L, 1, D_eff), (1, 1, P))
    else:
        w_packed = w_t
        b_packed = b.reshape(L, 1, D_eff)

    return w_packed.astype(matmul_dtype), b_packed, P, D_eff, Dp


# ------------------------------ forward runner ------------------------------

def _forward_packed(z, w_packed, b_packed, *, P, D_eff, Dp, matmul_dtype,
                    approx_gelu, max_tile_rows, num_cores, vmem_cap):
    B, D = z.shape
    L = w_packed.shape[0]
    kernel = functools.partial(_mlp_kernel, L, matmul_dtype, approx_gelu)

    z_in = z if D_eff == D else jnp.zeros((B, D_eff), z.dtype).at[:, :D].set(z)
    rows_min = pl.cdiv(B, P)  # packed rows needed to cover B

    def run(cores, use_buffered, core_parallel):
        # ---- batch tiling: 1 grid step on 1-TC parts; split only for v7x ----
        if cores > 1 and rows_min >= cores * _SUBLANE:
            n_tiles = _round_up(max(cores, pl.cdiv(rows_min, max_tile_rows)), cores)
        else:
            cores = 1
            n_tiles = pl.cdiv(rows_min, max_tile_rows)
        tile_rows = _round_up(pl.cdiv(rows_min, n_tiles), _SUBLANE)
        rows_pad = n_tiles * tile_rows
        B_pad = rows_pad * P

        if B_pad != B:
            z_p = jnp.zeros((B_pad, D_eff), z.dtype).at[:B].set(z_in)
        else:
            z_p = z_in                      # contiguous reshape only — no copy
        z_packed = z_p.reshape(rows_pad, Dp)

        # ---- VMEM budget (generation-aware capacity, no double counting) ----
        itemsize = jnp.dtype(matmul_dtype).itemsize
        w_bufs = 1 if use_buffered else 2
        vmem_need = (4 * tile_rows * Dp * 4             # in+out tiles, 2-buffered
                     + w_bufs * L * Dp * Dp * itemsize  # resident weights
                     + w_bufs * L * Dp * 4)             # resident biases
        vmem_limit = int(min(max(vmem_need + (8 << 20), 16 << 20),
                             (vmem_cap * 3) // 4))

        spec_kwargs = dict(pipeline_mode=pl.Buffered(1)) if use_buffered else {}
        w_spec = pl.BlockSpec((L, Dp, Dp), lambda i: (0, 0, 0), **spec_kwargs)
        b_spec = pl.BlockSpec((L, 1, Dp), lambda i: (0, 0, 0), **spec_kwargs)

        dim_sem = ((pltpu.CORE_PARALLEL,) if (core_parallel and cores > 1)
                   else ("arbitrary",))

        out_packed = pl.pallas_call(
            kernel,
            out_shape=jax.ShapeDtypeStruct((rows_pad, Dp), z.dtype),
            grid_spec=pltpu.PrefetchScalarGridSpec(
                num_scalar_prefetch=0,
                grid=(n_tiles,),
                in_specs=[
                    pl.BlockSpec((tile_rows, Dp), lambda i: (i, 0)),  # z tile
                    w_spec,                                           # all weights
                    b_spec,                                           # all biases
                ],
                out_specs=pl.BlockSpec((tile_rows, Dp), lambda i: (i, 0)),
            ),
            compiler_params=pltpu.CompilerParams(
                dimension_semantics=dim_sem,
                vmem_limit_bytes=vmem_limit,
            ),
        )(z_packed, w_packed, b_packed)

        out = out_packed.reshape(B_pad, D_eff)
        if B_pad != B or D_eff != D:
            out = out[:B, :D]
        return out

    # Preferred config first; degrade gracefully if a feature is unsupported.
    configs = []
    if num_cores > 1:
        configs.append((num_cores, True, True))   # v7x: 2-way split, core-sharded
    configs.append((1, True, False))              # single grid step, Buffered(1)
    configs.append((1, False, False))             # plain fallback
    last_err = None
    for cores, buf, cp in configs:
        try:
            return run(cores, buf, cp)
        except Exception as e:                    # fall back to simpler config
            last_err = e
    raise last_err


# --------------------------------- public API --------------------------------

def make_node_func_rna(weights, biases, *, matmul_dtype=jnp.bfloat16,
                       approx_gelu=False, max_tile_rows=128,
                       pack_width=None, num_tensorcores=None):
    """Pack parameters ONCE and return forward(t, z) for repeated ODE evals.

    weights: (L, D, D) float32, PyTorch nn.Linear (out, in) layout.
    biases:  (L, D) float32.
    """
    gen = _tpu_generation()
    if pack_width is None:
        pack_width = _default_pack_width(gen)
    if num_tensorcores is None:
        num_tensorcores = _num_tensorcores(gen)
    vmem_cap = _vmem_capacity_bytes(gen)

    w_packed, b_packed, P, D_eff, Dp = _pack_params(
        jnp.asarray(weights, jnp.float32), jnp.asarray(biases, jnp.float32),
        pack_width, matmul_dtype)
    w_packed = jax.block_until_ready(w_packed)
    b_packed = jax.block_until_ready(b_packed)

    def forward(t, z):
        del t  # node_func_rna ignores t
        return _forward_packed(
            z, w_packed, b_packed, P=P, D_eff=D_eff, Dp=Dp,
            matmul_dtype=matmul_dtype, approx_gelu=approx_gelu,
            max_tile_rows=max_tile_rows, num_cores=num_tensorcores,
            vmem_cap=vmem_cap)

    return forward


def node_func_rna_forward(t, z, weights, biases, **kwargs):
    """One-shot convenience wrapper (packs weights on every call).
    For repeated evaluations (an ODE solve) use make_node_func_rna once."""
    return make_node_func_rna(weights, biases, **kwargs)(t, z)


# -------------------------------- reference ----------------------------------

def _reference_forward(z, weights, biases, matmul_dtype=None):
    """Pure-JAX reference with PyTorch nn.Linear semantics (y = x @ W.T + b)."""
    x = z.astype(jnp.float32)
    L = weights.shape[0]
    for l in range(L):
        w = weights[l].T
        if matmul_dtype is not None:
            y = jnp.dot(x.astype(matmul_dtype), w.astype(matmul_dtype),
                        preferred_element_type=jnp.float32)
        else:
            y = x @ w
        x = y + biases[l]
        if l < L - 1:
            x = _gelu_exact(x)
    return x


if __name__ == "__main__":
    zx_dim = 32
    num_layer = 3
    batch = 128

    key = jax.random.PRNGKey(0)
    k_z, k_w, k_b = jax.random.split(key, 3)

    # Deterministic synthetic parameters in PyTorch nn.Linear layout/scale.
    bound = 1.0 / math.sqrt(zx_dim)
    weights = jax.random.uniform(
        k_w, (num_layer, zx_dim, zx_dim), minval=-bound, maxval=bound,
        dtype=jnp.float32)                              # (out, in) layout
    biases = jax.random.uniform(
        k_b, (num_layer, zx_dim), minval=-bound, maxval=bound, dtype=jnp.float32)
    z = jax.random.normal(k_z, (batch, zx_dim), dtype=jnp.float32)
    t = jnp.float32(0.0)  # unused, kept for signature parity

    # Pack once, evaluate repeatedly (the neural-ODE usage pattern).
    node_func = make_node_func_rna(weights, biases)
    out = jax.block_until_ready(node_func(t, z))
    out2 = jax.block_until_ready(node_func(t, z + 1.0))   # re-uses packed params
    assert out.shape == (batch, zx_dim) and out2.shape == (batch, zx_dim)

    # Strict check against a reference using the same bf16 matmul inputs.
    ref_matched = _reference_forward(z, weights, biases, matmul_dtype=jnp.bfloat16)
    assert jnp.allclose(out, ref_matched, atol=1e-4, rtol=1e-4), \
        "mismatch vs. matched-precision reference"

    # Sanity check against the full-f32 (PyTorch-parity) reference.
    ref_f32 = _reference_forward(z, weights, biases)
    assert jnp.allclose(out, ref_f32, atol=1e-1, rtol=1e-1), \
        "mismatch vs. f32 reference"

    print("KERNEL_OK")
</pallas_src>

<mosaic_0001>
module attributes {stable_mosaic.version = 11 : i64} {
  func.func @_mlp_kernel(%arg0: i32, %arg1: memref<16x256xf32, #tpu.memory_space<vmem>>, %arg2: memref<3x256x256xbf16, #tpu.memory_space<vmem>>, %arg3: memref<3x1x256xf32, #tpu.memory_space<vmem>>, %arg4: memref<16x256xf32, #tpu.memory_space<vmem>>) attributes {dimension_semantics = [#tpu.dimension_semantics<arbitrary>], iteration_bounds = array<i64: 1>, scalar_prefetch = 0 : i64, scratch_operands = 0 : i64, tpu.core_type = #tpu.core_type<tc>, window_params = [{transform_indices = @transform_0, window_bounds = array<i64: 16, 256>}, {pipeline_mode = #tpu.pipeline_mode<synchronous>, transform_indices = @transform_1, window_bounds = array<i64: 3, 256, 256>}, {pipeline_mode = #tpu.pipeline_mode<synchronous>, transform_indices = @transform_2, window_bounds = array<i64: 3, 1, 256>}, {transform_indices = @transform_3, window_bounds = array<i64: 16, 256>}]} {
    %c0 = arith.constant 0 : index
    %c0_0 = arith.constant 0 : index
    %0 = vector.load %arg1[%c0, %c0_0] : memref<16x256xf32, #tpu.memory_space<vmem>>, vector<16x256xf32>
    %1 = arith.truncf %0 : vector<16x256xf32> to vector<16x256xbf16>
    %c0_1 = arith.constant 0 : index
    %c0_2 = arith.constant 0 : index
    %c0_3 = arith.constant 0 : index
    %2 = vector.load %arg2[%c0_1, %c0_2, %c0_3] : memref<3x256x256xbf16, #tpu.memory_space<vmem>>, vector<1x256x256xbf16>
    %3 = vector.shape_cast %2 : vector<1x256x256xbf16> to vector<256x256xbf16>
    %cst = arith.constant dense<0.000000e+00> : vector<16x256xf32>
    %4 = tpu.matmul %1, %3, %cst {dimension_numbers = #tpu.dot_dimension_numbers<[1], [0], [0], [1], [0, 0, 1, 1], [], []>} : vector<16x256xbf16>, vector<256x256xbf16>, vector<16x256xf32> -> vector<16x256xf32>
    %c0_4 = arith.constant 0 : index
    %c0_5 = arith.constant 0 : index
    %c0_6 = arith.constant 0 : index
    %5 = vector.load %arg3[%c0_4, %c0_5, %c0_6] : memref<3x1x256xf32, #tpu.memory_space<vmem>>, vector<1x1x256xf32>
    %6 = vector.shape_cast %5 : vector<1x1x256xf32> to vector<1x256xf32>
    %7 = vector.broadcast %6 : vector<1x256xf32> to vector<16x256xf32>
    %8 = arith.addf %4, %7 : vector<16x256xf32>
    %cst_7 = arith.constant 5.000000e-01 : f32
    %9 = vector.broadcast %cst_7 : f32 to vector<16x256xf32>
    %10 = arith.mulf %9, %8 : vector<16x256xf32>
    %cst_8 = arith.constant 0.707106769 : f32
    %11 = vector.broadcast %cst_8 : f32 to vector<16x256xf32>
    %12 = arith.mulf %8, %11 : vector<16x256xf32>
    %13 = math.erf %12 : vector<16x256xf32>
    %cst_9 = arith.constant 1.000000e+00 : f32
    %14 = vector.broadcast %cst_9 : f32 to vector<16x256xf32>
    %15 = arith.addf %14, %13 : vector<16x256xf32>
    %16 = arith.mulf %10, %15 : vector<16x256xf32>
    %17 = arith.truncf %16 : vector<16x256xf32> to vector<16x256xbf16>
    %c1 = arith.constant 1 : index
    %c0_10 = arith.constant 0 : index
    %c0_11 = arith.constant 0 : index
    %18 = vector.load %arg2[%c1, %c0_10, %c0_11] : memref<3x256x256xbf16, #tpu.memory_space<vmem>>, vector<1x256x256xbf16>
    %19 = vector.shape_cast %18 : vector<1x256x256xbf16> to vector<256x256xbf16>
    %cst_12 = arith.constant dense<0.000000e+00> : vector<16x256xf32>
    %20 = tpu.matmul %17, %19, %cst_12 {dimension_numbers = #tpu.dot_dimension_numbers<[1], [0], [0], [1], [0, 0, 1, 1], [], []>} : vector<16x256xbf16>, vector<256x256xbf16>, vector<16x256xf32> -> vector<16x256xf32>
    %c1_13 = arith.constant 1 : index
    %c0_14 = arith.constant 0 : index
    %c0_15 = arith.constant 0 : index
    %21 = vector.load %arg3[%c1_13, %c0_14, %c0_15] : memref<3x1x256xf32, #tpu.memory_space<vmem>>, vector<1x1x256xf32>
    %22 = vector.shape_cast %21 : vector<1x1x256xf32> to vector<1x256xf32>
    %23 = vector.broadcast %22 : vector<1x256xf32> to vector<16x256xf32>
    %24 = arith.addf %20, %23 : vector<16x256xf32>
    %cst_16 = arith.constant 5.000000e-01 : f32
    %25 = vector.broadcast %cst_16 : f32 to vector<16x256xf32>
    %26 = arith.mulf %25, %24 : vector<16x256xf32>
    %cst_17 = arith.constant 0.707106769 : f32
    %27 = vector.broadcast %cst_17 : f32 to vector<16x256xf32>
    %28 = arith.mulf %24, %27 : vector<16x256xf32>
    %29 = math.erf %28 : vector<16x256xf32>
    %cst_18 = arith.constant 1.000000e+00 : f32
    %30 = vector.broadcast %cst_18 : f32 to vector<16x256xf32>
    %31 = arith.addf %30, %29 : vector<16x256xf32>
    %32 = arith.mulf %26, %31 : vector<16x256xf32>
    %33 = arith.truncf %32 : vector<16x256xf32> to vector<16x256xbf16>
    %c2 = arith.constant 2 : index
    %c0_19 = arith.constant 0 : index
    %c0_20 = arith.constant 0 : index
    %34 = vector.load %arg2[%c2, %c0_19, %c0_20] : memref<3x256x256xbf16, #tpu.memory_space<vmem>>, vector<1x256x256xbf16>
    %35 = vector.shape_cast %34 : vector<1x256x256xbf16> to vector<256x256xbf16>
    %cst_21 = arith.constant dense<0.000000e+00> : vector<16x256xf32>
    %36 = tpu.matmul %33, %35, %cst_21 {dimension_numbers = #tpu.dot_dimension_numbers<[1], [0], [0], [1], [0, 0, 1, 1], [], []>} : vector<16x256xbf16>, vector<256x256xbf16>, vector<16x256xf32> -> vector<16x256xf32>
    %c2_22 = arith.constant 2 : index
    %c0_23 = arith.constant 0 : index
    %c0_24 = arith.constant 0 : index
    %37 = vector.load %arg3[%c2_22, %c0_23, %c0_24] : memref<3x1x256xf32, #tpu.memory_space<vmem>>, vector<1x1x256xf32>
    %38 = vector.shape_cast %37 : vector<1x1x256xf32> to vector<1x256xf32>
    %39 = vector.broadcast %38 : vector<1x256xf32> to vector<16x256xf32>
    %40 = arith.addf %36, %39 : vector<16x256xf32>
    %c0_25 = arith.constant 0 : index
    %c0_26 = arith.constant 0 : index
    %41 = vector.load %arg4[%c0_25, %c0_26] : memref<16x256xf32, #tpu.memory_space<vmem>>, vector<16x256xf32>
    tpu.vector_store %arg4[%c0_25, %c0_26], %40 {strides = array<i32>} : memref<16x256xf32, #tpu.memory_space<vmem>>, vector<16x256xf32>,
    return
  }
  func.func @transform_0(%arg0: i32) -> (i32, i32) {
    %c0_i32 = arith.constant 0 : i32
    %c0_i32_0 = arith.constant 0 : i32
    return %arg0, %c0_i32 : i32, i32
  }
  func.func @transform_1(%arg0: i32) -> (i32, i32, i32) {
    %c0_i32 = arith.constant 0 : i32
    %c0_i32_0 = arith.constant 0 : i32
    %c0_i32_1 = arith.constant 0 : i32
    %c0_i32_2 = arith.constant 0 : i32
    return %c0_i32, %c0_i32_0, %c0_i32_1 : i32, i32, i32
  }
  func.func @transform_2(%arg0: i32) -> (i32, i32, i32) {
    %c0_i32 = arith.constant 0 : i32
    %c0_i32_0 = arith.constant 0 : i32
    %c0_i32_1 = arith.constant 0 : i32
    %c0_i32_2 = arith.constant 0 : i32
    return %c0_i32, %c0_i32_0, %c0_i32_1 : i32, i32, i32
  }
  func.func @transform_3(%arg0: i32) -> (i32, i32) {
    %c0_i32 = arith.constant 0 : i32
    %c0_i32_0 = arith.constant 0 : i32
    return %arg0, %c0_i32 : i32, i32
  }
}

module attributes {stable_mosaic.version = 11 : i64} {
  func.func @_mlp_kernel(%arg0: i32, %arg1: memref<16x256xf32, #tpu.memory_space<vmem>>, %arg2: memref<3x256x256xbf16, #tpu.memory_space<vmem>>, %arg3: memref<3x1x256xf32, #tpu.memory_space<vmem>>, %arg4: memref<16x256xf32, #tpu.memory_space<vmem>>) attributes {dimension_semantics = [#tpu.dimension_semantics<arbitrary>], iteration_bounds = array<i64: 1>, scalar_prefetch = 0 : i64, scratch_operands = 0 : i64, tpu.core_type = #tpu.core_type<tc>, window_params = [{transform_indices = @transform_0, window_bounds = array<i64: 16, 256>}, {pipeline_mode = #tpu.pipeline_mode<synchronous>, transform_indices = @transform_1, window_bounds = array<i64: 3, 256, 256>}, {pipeline_mode = #tpu.pipeline_mode<synchronous>, transform_indices = @transform_2, window_bounds = array<i64: 3, 1, 256>}, {transform_indices = @transform_3, window_bounds = array<i64: 16, 256>}]} {
    %c0 = arith.constant 0 : index
    %c0_0 = arith.constant 0 : index
    %0 = vector.load %arg1[%c0, %c0_0] : memref<16x256xf32, #tpu.memory_space<vmem>>, vector<16x256xf32>
    %1 = arith.truncf %0 : vector<16x256xf32> to vector<16x256xbf16>
    %c0_1 = arith.constant 0 : index
    %c0_2 = arith.constant 0 : index
    %c0_3 = arith.constant 0 : index
    %2 = vector.load %arg2[%c0_1, %c0_2, %c0_3] : memref<3x256x256xbf16, #tpu.memory_space<vmem>>, vector<1x256x256xbf16>
    %3 = vector.shape_cast %2 : vector<1x256x256xbf16> to vector<256x256xbf16>
    %cst = arith.constant dense<0.000000e+00> : vector<16x256xf32>
    %4 = tpu.matmul %1, %3, %cst {dimension_numbers = #tpu.dot_dimension_numbers<[1], [0], [0], [1], [0, 0, 1, 1], [], []>} : vector<16x256xbf16>, vector<256x256xbf16>, vector<16x256xf32> -> vector<16x256xf32>
    %c0_4 = arith.constant 0 : index
    %c0_5 = arith.constant 0 : index
    %c0_6 = arith.constant 0 : index
    %5 = vector.load %arg3[%c0_4, %c0_5, %c0_6] : memref<3x1x256xf32, #tpu.memory_space<vmem>>, vector<1x1x256xf32>
    %6 = vector.shape_cast %5 : vector<1x1x256xf32> to vector<1x256xf32>
    %7 = vector.broadcast %6 : vector<1x256xf32> to vector<16x256xf32>
    %8 = arith.addf %4, %7 : vector<16x256xf32>
    %cst_7 = arith.constant 5.000000e-01 : f32
    %9 = vector.broadcast %cst_7 : f32 to vector<16x256xf32>
    %10 = arith.mulf %9, %8 : vector<16x256xf32>
    %cst_8 = arith.constant 0.707106769 : f32
    %11 = vector.broadcast %cst_8 : f32 to vector<16x256xf32>
    %12 = arith.mulf %8, %11 : vector<16x256xf32>
    %13 = math.erf %12 : vector<16x256xf32>
    %cst_9 = arith.constant 1.000000e+00 : f32
    %14 = vector.broadcast %cst_9 : f32 to vector<16x256xf32>
    %15 = arith.addf %14, %13 : vector<16x256xf32>
    %16 = arith.mulf %10, %15 : vector<16x256xf32>
    %17 = arith.truncf %16 : vector<16x256xf32> to vector<16x256xbf16>
    %c1 = arith.constant 1 : index
    %c0_10 = arith.constant 0 : index
    %c0_11 = arith.constant 0 : index
    %18 = vector.load %arg2[%c1, %c0_10, %c0_11] : memref<3x256x256xbf16, #tpu.memory_space<vmem>>, vector<1x256x256xbf16>
    %19 = vector.shape_cast %18 : vector<1x256x256xbf16> to vector<256x256xbf16>
    %cst_12 = arith.constant dense<0.000000e+00> : vector<16x256xf32>
    %20 = tpu.matmul %17, %19, %cst_12 {dimension_numbers = #tpu.dot_dimension_numbers<[1], [0], [0], [1], [0, 0, 1, 1], [], []>} : vector<16x256xbf16>, vector<256x256xbf16>, vector<16x256xf32> -> vector<16x256xf32>
    %c1_13 = arith.constant 1 : index
    %c0_14 = arith.constant 0 : index
    %c0_15 = arith.constant 0 : index
    %21 = vector.load %arg3[%c1_13, %c0_14, %c0_15] : memref<3x1x256xf32, #tpu.memory_space<vmem>>, vector<1x1x256xf32>
    %22 = vector.shape_cast %21 : vector<1x1x256xf32> to vector<1x256xf32>
    %23 = vector.broadcast %22 : vector<1x256xf32> to vector<16x256xf32>
    %24 = arith.addf %20, %23 : vector<16x256xf32>
    %cst_16 = arith.constant 5.000000e-01 : f32
    %25 = vector.broadcast %cst_16 : f32 to vector<16x256xf32>
    %26 = arith.mulf %25, %24 : vector<16x256xf32>
    %cst_17 = arith.constant 0.707106769 : f32
    %27 = vector.broadcast %cst_17 : f32 to vector<16x256xf32>
    %28 = arith.mulf %24, %27 : vector<16x256xf32>
    %29 = math.erf %28 : vector<16x256xf32>
    %cst_18 = arith.constant 1.000000e+00 : f32
    %30 = vector.broadcast %cst_18 : f32 to vector<16x256xf32>
    %31 = arith.addf %30, %29 : vector<16x256xf32>
    %32 = arith.mulf %26, %31 : vector<16x256xf32>
    %33 = arith.truncf %32 : vector<16x256xf32> to vector<16x256xbf16>
    %c2 = arith.constant 2 : index
    %c0_19 = arith.constant 0 : index
    %c0_20 = arith.constant 0 : index
    %34 = vector.load %arg2[%c2, %c0_19, %c0_20] : memref<3x256x256xbf16, #tpu.memory_space<vmem>>, vector<1x256x256xbf16>
    %35 = vector.shape_cast %34 : vector<1x256x256xbf16> to vector<256x256xbf16>
    %cst_21 = arith.constant dense<0.000000e+00> : vector<16x256xf32>
    %36 = tpu.matmul %33, %35, %cst_21 {dimension_numbers = #tpu.dot_dimension_numbers<[1], [0], [0], [1], [0, 0, 1, 1], [], []>} : vector<16x256xbf16>, vector<256x256xbf16>, vector<16x256xf32> -> vector<16x256xf32>
    %c2_22 = arith.constant 2 : index
    %c0_23 = arith.constant 0 : index
    %c0_24 = arith.constant 0 : index
    %37 = vector.load %arg3[%c2_22, %c0_23, %c0_24] : memref<3x1x256xf32, #tpu.memory_space<vmem>>, vector<1x1x256xf32>
    %38 = vector.shape_cast %37 : vector<1x1x256xf32> to vector<1x256xf32>
    %39 = vector.broadcast %38 : vector<1x256xf32> to vector<16x256xf32>
    %40 = arith.addf %36, %39 : vector<16x256xf32>
    %c0_25 = arith.constant 0 : index
    %c0_26 = arith.constant 0 : index
    %41 = vector.load %arg4[%c0_25, %c0_26] : memref<16x256xf32, #tpu.memory_space<vmem>>, vector<16x256xf32>
    tpu.vector_store %arg4[%c0_25, %c0_26], %40 {strides = array<i32>} : memref<16x256xf32, #tpu.memory_space<vmem>>, vector<16x256xf32>,
    return
  }
  func.func @transform_0(%arg0: i32) -> (i32, i32) {
    %c0_i32 = arith.constant 0 : i32
    %c0_i32_0 = arith.constant 0 : i32
    return %arg0, %c0_i32 : i32, i32
  }
  func.func @transform_1(%arg0: i32) -> (i32, i32, i32) {
    %c0_i32 = arith.constant 0 : i32
    %c0_i32_0 = arith.constant 0 : i32
    %c0_i32_1 = arith.constant 0 : i32
    %c0_i32_2 = arith.constant 0 : i32
    return %c0_i32, %c0_i32_0, %c0_i32_1 : i32, i32, i32
  }
  func.func @transform_2(%arg0: i32) -> (i32, i32, i32) {
    %c0_i32 = arith.constant 0 : i32
    %c0_i32_0 = arith.constant 0 : i32
    %c0_i32_1 = arith.constant 0 : i32
    %c0_i32_2 = arith.constant 0 : i32
    return %c0_i32, %c0_i32_0, %c0_i32_1 : i32, i32, i32
  }
  func.func @transform_3(%arg0: i32) -> (i32, i32) {
    %c0_i32 = arith.constant 0 : i32
    %c0_i32_0 = arith.constant 0 : i32
    return %arg0, %c0_i32 : i32, i32
  }
}

</mosaic_0001>

<llo_original>
// kernel: tpu_custom_call.1
$region0: #{tpu_custom_call.1}
  #allocation0 [shape = 'u32[]', space=smem, size = 0x4, offset = 0x4, fixed_abs, tag = 'smem constant byte address 0x4 - core index']
  #allocation1 [shape = 'u32[144,128]{1,0:T(1,128)}', space=vmem, size = 0x12000, scoped, tag = 'internal scratch']
  %s0 = inlined_call_operand.hbm [shape: f32[16,256], index: 0, kind: input, shape index: {}]
  %s1 = inlined_call_operand.hbm [shape: bf16[3,256,256], index: 1, kind: input, shape index: {}]
  %s2 = inlined_call_operand.vmem [shape: f32[3,1,256], index: 2, kind: input, shape index: {}]
  %s3 = inlined_call_operand.hbm [shape: f32[16,256], index: 3, kind: output, shape index: {}]
  %s4 = sld [smem:[#allocation0]]
  $region30: #{tpu_custom_call.1} parent=0
    _
  %s6 = ssub.s32 1, %s4
  %s7 = scalar_select 0, %s6, %s4
  $region1: #{tpu_custom_call.1} parent=0
    #allocation2 [shape = 'u8[16384]{0}', space=vmem, size = 0x4000, scoped, tag = 'input window, operand 0, single buffered']
    #allocation3 [shape = 's32[1]{0}', space=sflag, size = 0x4, scoped, tag = 'scoped memory for tpu_custom_call.1']
    #allocation4 [shape = 's32[1]{0}', space=sflag, size = 0x4, scoped, tag = 'scoped memory for tpu_custom_call.1']
    #allocation5 [shape = 'u8[393216]{0}', space=vmem, size = 0x60000, scoped, tag = 'input window, operand 1, single buffered']
    #allocation6 [shape = 's32[1]{0}', space=sflag, size = 0x4, scoped, tag = 'scoped memory for tpu_custom_call.1']
    #allocation7 [shape = 'u8[16384]{0}', space=vmem, size = 0x4000, scoped, tag = 'output window, operand 0, single buffered']
    %8 = vsyncpa [#allocation3], 0
    %9 = vsyncpa [#allocation6], 0
    %10 = vsyncpa [#allocation4], 0
    // Predicated region
    $region2: #{tpu_custom_call.1} parent=1 // pred_check
      _
    $region3: #{tpu_custom_call.1} parent=1 // pred_check_branch
      %12 = sbr.rel (0) target = $region5
    $region4: #{tpu_custom_call.1} parent=1 // pred_region
      %s14 = ssub.s32 512, 512
      %15 = vsyncadd [#allocation3], %s14
      %s16 = sshll.u32 [#allocation2], 4
      %s17 = int_to_ptr.vmem [resolvable:$true] %s16
      %22 = dma.hbm_to_vmem [thread:$0]  %s0, 512, %s17, [#allocation3], 256, 256, 16
    $region5: #{tpu_custom_call.1} parent=1 // pred_fallthru
      _
    // Predicated region
    $region6: #{tpu_custom_call.1} parent=1 // pred_check
      _
    $region7: #{tpu_custom_call.1} parent=1 // pred_check_branch
      %24 = sbr.rel (0) target = $region9
    $region8: #{tpu_custom_call.1} parent=1 // pred_region
      %s26 = ssub.s32 12288, 12288
      %27 = vsyncadd [#allocation6], %s26
      %s28 = sshll.u32 [#allocation5], 4
      %s29 = int_to_ptr.vmem [resolvable:$true] %s28
      %34 = dma.hbm_to_vmem [thread:$0]  %s1, 12288, %s29, [#allocation6], 128, 128, 8
    $region9: #{tpu_custom_call.1} parent=1 // pred_fallthru
      _
    // Predicated region
    $region10: #{tpu_custom_call.1} parent=1 // pred_check
      _
    $region11: #{tpu_custom_call.1} parent=1 // pred_check_branch
      %36 = sbr.rel (0) target = $region13
    $region12: #{tpu_custom_call.1} parent=1 // pred_region
      _
    $region13: #{tpu_custom_call.1} parent=1 // pred_fallthru
      _
    // Predicated region
    $region14: #{tpu_custom_call.1} parent=1 // pred_check
      _
    $region15: #{tpu_custom_call.1} parent=1 // pred_check_branch
      %38 = sbr.rel (0) target = $region17
    $region16: #{tpu_custom_call.1} parent=1 // pred_region
      %39 = dma.done [#allocation3], 512
    $region17: #{tpu_custom_call.1} parent=1 // pred_fallthru
      _
    // Predicated region
    $region18: #{tpu_custom_call.1} parent=1 // pred_check
      _
    $region19: #{tpu_custom_call.1} parent=1 // pred_check_branch
      %41 = sbr.rel (0) target = $region21
    $region20: #{tpu_custom_call.1} parent=1 // pred_region
      %42 = dma.done [#allocation6], 12288
    $region21: #{tpu_custom_call.1} parent=1 // pred_fallthru
      _
    %v43 = vld [vmem:[#allocation2] sm:$0xff]
    %v44 = vld [vmem:[#allocation2 + $0x8] sm:$0xff]
    %v45 = vld [vmem:[#allocation2 + $0x10] sm:$0xff]
    %v46 = vld [vmem:[#allocation2 + $0x18] sm:$0xff]
    %v47 = vpack.c.bf16 %v45, %v43
    %v48 = vpack.c.bf16 %v46, %v44
    %v49 = vld [vmem:[#allocation5] sm:$0xff]
    %v50 = vld [vmem:[#allocation5 + $0x8] sm:$0xff]
    %v51 = vld [vmem:[#allocation5 + $0x10] sm:$0xff]
    %v52 = vld [vmem:[#allocation5 + $0x18] sm:$0xff]
    %v53 = vld [vmem:[#allocation5 + $0x20] sm:$0xff]
    %v54 = vld [vmem:[#allocation5 + $0x28] sm:$0xff]
    %v55 = vld [vmem:[#allocation5 + $0x30] sm:$0xff]
    %v56 = vld [vmem:[#allocation5 + $0x38] sm:$0xff]
    %v57 = vld [vmem:[#allocation5 + $0x40] sm:$0xff]
    %v58 = vld [vmem:[#allocation5 + $0x48] sm:$0xff]
    %v59 = vld [vmem:[#allocation5 + $0x50] sm:$0xff]
    %v60 = vld [vmem:[#allocation5 + $0x58] sm:$0xff]
    %v61 = vld [vmem:[#allocation5 + $0x60] sm:$0xff]
    %v62 = vld [vmem:[#allocation5 + $0x68] sm:$0xff]
    %v63 = vld [vmem:[#allocation5 + $0x70] sm:$0xff]
    %v64 = vld [vmem:[#allocation5 + $0x78] sm:$0xff]
    %v65 = vld [vmem:[#allocation5 + $0x80] sm:$0xff]
    %v66 = vld [vmem:[#allocation5 + $0x88] sm:$0xff]
    %v67 = vld [vmem:[#allocation5 + $0x90] sm:$0xff]
    %v68 = vld [vmem:[#allocation5 + $0x98] sm:$0xff]
    %v69 = vld [vmem:[#allocation5 + $0xa0] sm:$0xff]
    %v70 = vld [vmem:[#allocation5 + $0xa8] sm:$0xff]
    %v71 = vld [vmem:[#allocation5 + $0xb0] sm:$0xff]
    %v72 = vld [vmem:[#allocation5 + $0xb8] sm:$0xff]
    %v73 = vld [vmem:[#allocation5 + $0xc0] sm:$0xff]
    %v74 = vld [vmem:[#allocation5 + $0xc8] sm:$0xff]
    %v75 = vld [vmem:[#allocation5 + $0xd0] sm:$0xff]
    %v76 = vld [vmem:[#allocation5 + $0xd8] sm:$0xff]
    %v77 = vld [vmem:[#allocation5 + $0xe0] sm:$0xff]
    %v78 = vld [vmem:[#allocation5 + $0xe8] sm:$0xff]
    %v79 = vld [vmem:[#allocation5 + $0xf0] sm:$0xff]
    %v80 = vld [vmem:[#allocation5 + $0xf8] sm:$0xff]
    %v81 = vld [vmem:[%s2] sm:$0x3]
    %v83 = vlaneseq
    %v84 = vshrl.u32 %v83, 7
    %v85 = vsub.s32 0, %v84
    %v86 = vrot.slane %v81, %v85
    %v87 = vlaneseq
    %v88 = vshrl.u32 %v87, 7
    %v89 = vsub.s32 1, %v88
    %v90 = vrot.slane %v81, %v89
    %v125 = vunpack.c.l.b16 %v49
    %v126 = vunpack.c.h.b16 %v49
    %v127 = vunpack.c.l.b16 %v50
    %v128 = vunpack.c.h.b16 %v50
    %v129 = vunpack.c.l.b16 %v51
    %v130 = vunpack.c.h.b16 %v51
    %v131 = vunpack.c.l.b16 %v52
    %v132 = vunpack.c.h.b16 %v52
    %v133 = vunpack.c.l.b16 %v53
    %v134 = vunpack.c.h.b16 %v53
    %v135 = vunpack.c.l.b16 %v54
    %v136 = vunpack.c.h.b16 %v54
    %v137 = vunpack.c.l.b16 %v55
    %v138 = vunpack.c.h.b16 %v55
    %v139 = vunpack.c.l.b16 %v56
    %v140 = vunpack.c.h.b16 %v56
    %v141 = vunpack.c.l.b16 %v57
    %v142 = vunpack.c.h.b16 %v57
    %v143 = vunpack.c.l.b16 %v58
    %v144 = vunpack.c.h.b16 %v58
    %v145 = vunpack.c.l.b16 %v59
    %v146 = vunpack.c.h.b16 %v59
    %v147 = vunpack.c.l.b16 %v60
    %v148 = vunpack.c.h.b16 %v60
    %v149 = vunpack.c.l.b16 %v61
    %v150 = vunpack.c.h.b16 %v61
    %v151 = vunpack.c.l.b16 %v62
    %v152 = vunpack.c.h.b16 %v62
    %v153 = vunpack.c.l.b16 %v63
    %v154 = vunpack.c.h.b16 %v63
    %v155 = vunpack.c.l.b16 %v64
    %v156 = vunpack.c.h.b16 %v64
    %v157 = vunpack.c.l.b16 %v65
    %v158 = vunpack.c.h.b16 %v65
    %v159 = vunpack.c.l.b16 %v66
    %v160 = vunpack.c.h.b16 %v66
    %v161 = vunpack.c.l.b16 %v67
    %v162 = vunpack.c.h.b16 %v67
    %v163 = vunpack.c.l.b16 %v68
    %v164 = vunpack.c.h.b16 %v68
    %v165 = vunpack.c.l.b16 %v69
    %v166 = vunpack.c.h.b16 %v69
    %v167 = vunpack.c.l.b16 %v70
    %v168 = vunpack.c.h.b16 %v70
    %v169 = vunpack.c.l.b16 %v71
    %v170 = vunpack.c.h.b16 %v71
    %v171 = vunpack.c.l.b16 %v72
    %v172 = vunpack.c.h.b16 %v72
    %v173 = vunpack.c.l.b16 %v73
    %v174 = vunpack.c.h.b16 %v73
    %v175 = vunpack.c.l.b16 %v74
    %v176 = vunpack.c.h.b16 %v74
    %v177 = vunpack.c.l.b16 %v75
    %v178 = vunpack.c.h.b16 %v75
    %v179 = vunpack.c.l.b16 %v76
    %v180 = vunpack.c.h.b16 %v76
    %v181 = vunpack.c.l.b16 %v77
    %v182 = vunpack.c.h.b16 %v77
    %v183 = vunpack.c.l.b16 %v78
    %v184 = vunpack.c.h.b16 %v78
    %v185 = vunpack.c.l.b16 %v79
    %v186 = vunpack.c.h.b16 %v79
    %v187 = vunpack.c.l.b16 %v80
    %v188 = vunpack.c.h.b16 %v80
    %v189 = vpack.c.b16 %v127, %v125
    %v190 = vpack.c.b16 %v128, %v126
    %v191 = vpack.c.b16 %v131, %v129
    %v192 = vpack.c.b16 %v132, %v130
    %v193 = vpack.c.b16 %v135, %v133
    %v194 = vpack.c.b16 %v136, %v134
    %v195 = vpack.c.b16 %v139, %v137
    %v196 = vpack.c.b16 %v140, %v138
    %v197 = vpack.c.b16 %v143, %v141
    %v198 = vpack.c.b16 %v144, %v142
    %v199 = vpack.c.b16 %v147, %v145
    %v200 = vpack.c.b16 %v148, %v146
    %v201 = vpack.c.b16 %v151, %v149
    %v202 = vpack.c.b16 %v152, %v150
    %v203 = vpack.c.b16 %v155, %v153
    %v204 = vpack.c.b16 %v156, %v154
    %v205 = vpack.c.b16 %v159, %v157
    %v206 = vpack.c.b16 %v160, %v158
    %v207 = vpack.c.b16 %v163, %v161
    %v208 = vpack.c.b16 %v164, %v162
    %v209 = vpack.c.b16 %v167, %v165
    %v210 = vpack.c.b16 %v168, %v166
    %v211 = vpack.c.b16 %v171, %v169
    %v212 = vpack.c.b16 %v172, %v170
    %v213 = vpack.c.b16 %v175, %v173
    %v214 = vpack.c.b16 %v176, %v174
    %v215 = vpack.c.b16 %v179, %v177
    %v216 = vpack.c.b16 %v180, %v178
    %v217 = vpack.c.b16 %v183, %v181
    %v218 = vpack.c.b16 %v184, %v182
    %v219 = vpack.c.b16 %v187, %v185
    %v220 = vpack.c.b16 %v188, %v186
    %253 = vmatprep.subr.bf16.mxu0 %v190
    %254 = vmatpush1.bf16.msra.mxu0 %v189
    %255 = vmatprep.subr.bf16.mxu0 %v192
    %256 = vmatpush1.bf16.msra.mxu0 %v191
    %257 = vmatprep.subr.bf16.mxu0 %v194
    %258 = vmatpush1.bf16.msra.mxu0 %v193
    %259 = vmatprep.subr.bf16.mxu0 %v196
    %260 = vmatpush1.bf16.msra.mxu0 %v195
    %261 = vmatprep.subr.bf16.mxu0 %v198
    %262 = vmatpush1.bf16.msra.mxu0 %v197
    %263 = vmatprep.subr.bf16.mxu0 %v200
    %264 = vmatpush1.bf16.msra.mxu0 %v199
    %265 = vmatprep.subr.bf16.mxu0 %v202
    %266 = vmatpush1.bf16.msra.mxu0 %v201
    %267 = vmatprep.subr.bf16.mxu0 %v204
    %268 = vmatpush1.bf16.msra.mxu0 %v203
    %269 = vmatprep.subr.bf16.mxu0 %v206
    %270 = vmatpush1.bf16.msra.mxu0 %v205
    %271 = vmatprep.subr.bf16.mxu0 %v208
    %272 = vmatpush1.bf16.msra.mxu0 %v207
    %273 = vmatprep.subr.bf16.mxu0 %v210
    %274 = vmatpush1.bf16.msra.mxu0 %v209
    %275 = vmatprep.subr.bf16.mxu0 %v212
    %276 = vmatpush1.bf16.msra.mxu0 %v211
    %277 = vmatprep.subr.bf16.mxu0 %v214
    %278 = vmatpush1.bf16.msra.mxu0 %v213
    %279 = vmatprep.subr.bf16.mxu0 %v216
    %280 = vmatpush1.bf16.msra.mxu0 %v215
    %281 = vmatprep.subr.bf16.mxu0 %v218
    %282 = vmatpush1.bf16.msra.mxu0 %v217
    %283 = vmatprep.subr.bf16.mxu0 %v220
    %284 = vmatpush1.bf16.msra.mxu0 %v219
    %285 = vmatprep.mubr.bf16.mxu0 %v48
    %286 = vmatmul.mubr.bf16.gmra.mrb[0].mxu0 %v47
    %v287 = vpop.f32.mrb[0].mxu0
    %v288 = vadd.f32 %v86, %v287
    %v289 = vpop.f32.mrb[0].mxu0
    %v290 = vadd.f32 %v90, %v289
    %v291 = vpop.f32.mrb[0].mxu0
    %v292 = vadd.f32 %v86, %v291
    %v293 = vpop.f32.mrb[0].mxu0
    %v294 = vadd.f32 %v90, %v293
    %295 = vdwg.mxu0
    %v296 = vmul.f32 %v288, 0.5
    %v297 = vmul.f32 %v290, 0.5
    %v298 = vmul.f32 %v292, 0.5
    %v299 = vmul.f32 %v294, 0.5
    %v300 = vmul.f32 %v288, 0.70710677
    %v301 = vmul.f32 %v290, 0.70710677
    %v302 = vmul.f32 %v292, 0.70710677
    %v303 = vmul.f32 %v294, 0.70710677
    %v304 = verf.f32.pop %v300
    %v305 = verf.f32.pop %v301
    %v306 = verf.f32.pop %v302
    %v307 = verf.f32.pop %v303
    %v308 = vadd.f32 %v304, 1.0
    %v309 = vadd.f32 %v305, 1.0
    %v310 = vadd.f32 %v306, 1.0
    %v311 = vadd.f32 %v307, 1.0
    %v312 = vmul.f32 %v296, %v308
    %v313 = vmul.f32 %v297, %v309
    %v314 = vmul.f32 %v298, %v310
    %v315 = vmul.f32 %v299, %v311
    %v316 = vpack.c.bf16 %v314, %v312
    %v317 = vpack.c.bf16 %v315, %v313
    %s318 = scalar_lea.vmem [#allocation5], 256
    %v319 = vld [vmem:[%s318] sm:$0xff]
    %v320 = vld [vmem:[%s318 + $0x8] sm:$0xff]
    %v321 = vld [vmem:[%s318 + $0x10] sm:$0xff]
    %v322 = vld [vmem:[%s318 + $0x18] sm:$0xff]
    %v323 = vld [vmem:[%s318 + $0x20] sm:$0xff]
    %v324 = vld [vmem:[%s318 + $0x28] sm:$0xff]
    %v325 = vld [vmem:[%s318 + $0x30] sm:$0xff]
    %v326 = vld [vmem:[%s318 + $0x38] sm:$0xff]
    %v327 = vld [vmem:[%s318 + $0x40] sm:$0xff]
    %v328 = vld [vmem:[%s318 + $0x48] sm:$0xff]
    %v329 = vld [vmem:[%s318 + $0x50] sm:$0xff]
    %v330 = vld [vmem:[%s318 + $0x58] sm:$0xff]
    %v331 = vld [vmem:[%s318 + $0x60] sm:$0xff]
    %v332 = vld [vmem:[%s318 + $0x68] sm:$0xff]
    %v333 = vld [vmem:[%s318 + $0x70] sm:$0xff]
    %v334 = vld [vmem:[%s318 + $0x78] sm:$0xff]
    %v335 = vld [vmem:[%s318 + $0x80] sm:$0xff]
    %v336 = vld [vmem:[%s318 + $0x88] sm:$0xff]
    %v337 = vld [vmem:[%s318 + $0x90] sm:$0xff]
    %v338 = vld [vmem:[%s318 + $0x98] sm:$0xff]
    %v339 = vld [vmem:[%s318 + $0xa0] sm:$0xff]
    %v340 = vld [vmem:[%s318 + $0xa8] sm:$0xff]
    %v341 = vld [vmem:[%s318 + $0xb0] sm:$0xff]
    %v342 = vld [vmem:[%s318 + $0xb8] sm:$0xff]
    %v343 = vld [vmem:[%s318 + $0xc0] sm:$0xff]
    %v344 = vld [vmem:[%s318 + $0xc8] sm:$0xff]
    %v345 = vld [vmem:[%s318 + $0xd0] sm:$0xff]
    %v346 = vld [vmem:[%s318 + $0xd8] sm:$0xff]
    %v347 = vld [vmem:[%s318 + $0xe0] sm:$0xff]
    %v348 = vld [vmem:[%s318 + $0xe8] sm:$0xff]
    %v349 = vld [vmem:[%s318 + $0xf0] sm:$0xff]
    %v350 = vld [vmem:[%s318 + $0xf8] sm:$0xff]
    %s351 = scalar_lea.vmem %s2, 2
    %v352 = vld [vmem:[%s351] sm:$0x3]
    %v354 = vlaneseq
    %v355 = vshrl.u32 %v354, 7
    %v356 = vsub.s32 0, %v355
    %v357 = vrot.slane %v352, %v356
    %v358 = vlaneseq
    %v359 = vshrl.u32 %v358, 7
    %v360 = vsub.s32 1, %v359
    %v361 = vrot.slane %v352, %v360
    %v396 = vunpack.c.l.b16 %v319
    %v397 = vunpack.c.h.b16 %v319
    %v398 = vunpack.c.l.b16 %v320
    %v399 = vunpack.c.h.b16 %v320
    %v400 = vunpack.c.l.b16 %v321
    %v401 = vunpack.c.h.b16 %v321
    %v402 = vunpack.c.l.b16 %v322
    %v403 = vunpack.c.h.b16 %v322
    %v404 = vunpack.c.l.b16 %v323
    %v405 = vunpack.c.h.b16 %v323
    %v406 = vunpack.c.l.b16 %v324
    %v407 = vunpack.c.h.b16 %v324
    %v408 = vunpack.c.l.b16 %v325
    %v409 = vunpack.c.h.b16 %v325
    %v410 = vunpack.c.l.b16 %v326
    %v411 = vunpack.c.h.b16 %v326
    %v412 = vunpack.c.l.b16 %v327
    %v413 = vunpack.c.h.b16 %v327
    %v414 = vunpack.c.l.b16 %v328
    %v415 = vunpack.c.h.b16 %v328
    %v416 = vunpack.c.l.b16 %v329
    %v417 = vunpack.c.h.b16 %v329
    %v418 = vunpack.c.l.b16 %v330
    %v419 = vunpack.c.h.b16 %v330
    %v420 = vunpack.c.l.b16 %v331
    %v421 = vunpack.c.h.b16 %v331
    %v422 = vunpack.c.l.b16 %v332
    %v423 = vunpack.c.h.b16 %v332
    %v424 = vunpack.c.l.b16 %v333
    %v425 = vunpack.c.h.b16 %v333
    %v426 = vunpack.c.l.b16 %v334
    %v427 = vunpack.c.h.b16 %v334
    %v428 = vunpack.c.l.b16 %v335
    %v429 = vunpack.c.h.b16 %v335
    %v430 = vunpack.c.l.b16 %v336
    %v431 = vunpack.c.h.b16 %v336
    %v432 = vunpack.c.l.b16 %v337
    %v433 = vunpack.c.h.b16 %v337
    %v434 = vunpack.c.l.b16 %v338
    %v435 = vunpack.c.h.b16 %v338
    %v436 = vunpack.c.l.b16 %v339
    %v437 = vunpack.c.h.b16 %v339
    %v438 = vunpack.c.l.b16 %v340
    %v439 = vunpack.c.h.b16 %v340
    %v440 = vunpack.c.l.b16 %v341
    %v441 = vunpack.c.h.b16 %v341
    %v442 = vunpack.c.l.b16 %v342
    %v443 = vunpack.c.h.b16 %v342
    %v444 = vunpack.c.l.b16 %v343
    %v445 = vunpack.c.h.b16 %v343
    %v446 = vunpack.c.l.b16 %v344
    %v447 = vunpack.c.h.b16 %v344
    %v448 = vunpack.c.l.b16 %v345
    %v449 = vunpack.c.h.b16 %v345
    %v450 = vunpack.c.l.b16 %v346
    %v451 = vunpack.c.h.b16 %v346
    %v452 = vunpack.c.l.b16 %v347
    %v453 = vunpack.c.h.b16 %v347
    %v454 = vunpack.c.l.b16 %v348
    %v455 = vunpack.c.h.b16 %v348
    %v456 = vunpack.c.l.b16 %v349
    %v457 = vunpack.c.h.b16 %v349
    %v458 = vunpack.c.l.b16 %v350
    %v459 = vunpack.c.h.b16 %v350
    %v460 = vpack.c.b16 %v398, %v396
    %v461 = vpack.c.b16 %v399, %v397
    %v462 = vpack.c.b16 %v402, %v400
    %v463 = vpack.c.b16 %v403, %v401
    %v464 = vpack.c.b16 %v406, %v404
    %v465 = vpack.c.b16 %v407, %v405
    %v466 = vpack.c.b16 %v410, %v408
    %v467 = vpack.c.b16 %v411, %v409
    %v468 = vpack.c.b16 %v414, %v412
    %v469 = vpack.c.b16 %v415, %v413
    %v470 = vpack.c.b16 %v418, %v416
    %v471 = vpack.c.b16 %v419, %v417
    %v472 = vpack.c.b16 %v422, %v420
    %v473 = vpack.c.b16 %v423, %v421
    %v474 = vpack.c.b16 %v426, %v424
    %v475 = vpack.c.b16 %v427, %v425
    %v476 = vpack.c.b16 %v430, %v428
    %v477 = vpack.c.b16 %v431, %v429
    %v478 = vpack.c.b16 %v434, %v432
    %v479 = vpack.c.b16 %v435, %v433
    %v480 = vpack.c.b16 %v438, %v436
    %v481 = vpack.c.b16 %v439, %v437
    %v482 = vpack.c.b16 %v442, %v440
    %v483 = vpack.c.b16 %v443, %v441
    %v484 = vpack.c.b16 %v446, %v444
    %v485 = vpack.c.b16 %v447, %v445
    %v486 = vpack.c.b16 %v450, %v448
    %v487 = vpack.c.b16 %v451, %v449
    %v488 = vpack.c.b16 %v454, %v452
    %v489 = vpack.c.b16 %v455, %v453
    %v490 = vpack.c.b16 %v458, %v456
    %v491 = vpack.c.b16 %v459, %v457
    %524 = vmatprep.subr.bf16.mxu0 %v461
    %525 = vmatpush1.bf16.msra.mxu0 %v460
    %526 = vmatprep.subr.bf16.mxu0 %v463
    %527 = vmatpush1.bf16.msra.mxu0 %v462
    %528 = vmatprep.subr.bf16.mxu0 %v465
    %529 = vmatpush1.bf16.msra.mxu0 %v464
    %530 = vmatprep.subr.bf16.mxu0 %v467
    %531 = vmatpush1.bf16.msra.mxu0 %v466
    %532 = vmatprep.subr.bf16.mxu0 %v469
    %533 = vmatpush1.bf16.msra.mxu0 %v468
    %534 = vmatprep.subr.bf16.mxu0 %v471
    %535 = vmatpush1.bf16.msra.mxu0 %v470
    %536 = vmatprep.subr.bf16.mxu0 %v473
    %537 = vmatpush1.bf16.msra.mxu0 %v472
    %538 = vmatprep.subr.bf16.mxu0 %v475
    %539 = vmatpush1.bf16.msra.mxu0 %v474
    %540 = vmatprep.subr.bf16.mxu0 %v477
    %541 = vmatpush1.bf16.msra.mxu0 %v476
    %542 = vmatprep.subr.bf16.mxu0 %v479
    %543 = vmatpush1.bf16.msra.mxu0 %v478
    %544 = vmatprep.subr.bf16.mxu0 %v481
    %545 = vmatpush1.bf16.msra.mxu0 %v480
    %546 = vmatprep.subr.bf16.mxu0 %v483
    %547 = vmatpush1.bf16.msra.mxu0 %v482
    %548 = vmatprep.subr.bf16.mxu0 %v485
    %549 = vmatpush1.bf16.msra.mxu0 %v484
    %550 = vmatprep.subr.bf16.mxu0 %v487
    %551 = vmatpush1.bf16.msra.mxu0 %v486
    %552 = vmatprep.subr.bf16.mxu0 %v489
    %553 = vmatpush1.bf16.msra.mxu0 %v488
    %554 = vmatprep.subr.bf16.mxu0 %v491
    %555 = vmatpush1.bf16.msra.mxu0 %v490
    %556 = vmatprep.mubr.bf16.mxu0 %v317
    %557 = vmatmul.mubr.bf16.gmra.mrb[0].mxu0 %v316
    %v558 = vpop.f32.mrb[0].mxu0
    %v559 = vadd.f32 %v357, %v558
    %v560 = vpop.f32.mrb[0].mxu0
    %v561 = vadd.f32 %v361, %v560
    %v562 = vpop.f32.mrb[0].mxu0
    %v563 = vadd.f32 %v357, %v562
    %v564 = vpop.f32.mrb[0].mxu0
    %v565 = vadd.f32 %v361, %v564
    %566 = vdwg.mxu0
    %v567 = vmul.f32 %v559, 0.5
    %v568 = vmul.f32 %v561, 0.5
    %v569 = vmul.f32 %v563, 0.5
    %v570 = vmul.f32 %v565, 0.5
    %v571 = vmul.f32 %v559, 0.70710677
    %v572 = vmul.f32 %v561, 0.70710677
    %v573 = vmul.f32 %v563, 0.70710677
    %v574 = vmul.f32 %v565, 0.70710677
    %v575 = verf.f32.pop %v571
    %v576 = verf.f32.pop %v572
    %v577 = verf.f32.pop %v573
    %v578 = verf.f32.pop %v574
    %v579 = vadd.f32 %v575, 1.0
    %v580 = vadd.f32 %v576, 1.0
    %v581 = vadd.f32 %v577, 1.0
    %v582 = vadd.f32 %v578, 1.0
    %v583 = vmul.f32 %v567, %v579
    %v584 = vmul.f32 %v568, %v580
    %v585 = vmul.f32 %v569, %v581
    %v586 = vmul.f32 %v570, %v582
    %v587 = vpack.c.bf16 %v585, %v583
    %v588 = vpack.c.bf16 %v586, %v584
    %s589 = scalar_lea.vmem [#allocation5], 512
    %v590 = vld [vmem:[%s589] sm:$0xff]
    %v591 = vld [vmem:[%s589 + $0x8] sm:$0xff]
    %v592 = vld [vmem:[%s589 + $0x10] sm:$0xff]
    %v593 = vld [vmem:[%s589 + $0x18] sm:$0xff]
    %v594 = vld [vmem:[%s589 + $0x20] sm:$0xff]
    %v595 = vld [vmem:[%s589 + $0x28] sm:$0xff]
    %v596 = vld [vmem:[%s589 + $0x30] sm:$0xff]
    %v597 = vld [vmem:[%s589 + $0x38] sm:$0xff]
    %v598 = vld [vmem:[%s589 + $0x40] sm:$0xff]
    %v599 = vld [vmem:[%s589 + $0x48] sm:$0xff]
    %v600 = vld [vmem:[%s589 + $0x50] sm:$0xff]
    %v601 = vld [vmem:[%s589 + $0x58] sm:$0xff]
    %v602 = vld [vmem:[%s589 + $0x60] sm:$0xff]
    %v603 = vld [vmem:[%s589 + $0x68] sm:$0xff]
    %v604 = vld [vmem:[%s589 + $0x70] sm:$0xff]
    %v605 = vld [vmem:[%s589 + $0x78] sm:$0xff]
    %v606 = vld [vmem:[%s589 + $0x80] sm:$0xff]
    %v607 = vld [vmem:[%s589 + $0x88] sm:$0xff]
    %v608 = vld [vmem:[%s589 + $0x90] sm:$0xff]
    %v609 = vld [vmem:[%s589 + $0x98] sm:$0xff]
    %v610 = vld [vmem:[%s589 + $0xa0] sm:$0xff]
    %v611 = vld [vmem:[%s589 + $0xa8] sm:$0xff]
    %v612 = vld [vmem:[%s589 + $0xb0] sm:$0xff]
    %v613 = vld [vmem:[%s589 + $0xb8] sm:$0xff]
    %v614 = vld [vmem:[%s589 + $0xc0] sm:$0xff]
    %v615 = vld [vmem:[%s589 + $0xc8] sm:$0xff]
    %v616 = vld [vmem:[%s589 + $0xd0] sm:$0xff]
    %v617 = vld [vmem:[%s589 + $0xd8] sm:$0xff]
    %v618 = vld [vmem:[%s589 + $0xe0] sm:$0xff]
    %v619 = vld [vmem:[%s589 + $0xe8] sm:$0xff]
    %v620 = vld [vmem:[%s589 + $0xf0] sm:$0xff]
    %v621 = vld [vmem:[%s589 + $0xf8] sm:$0xff]
    %s622 = scalar_lea.vmem %s2, 4
    %v623 = vld [vmem:[%s622] sm:$0x3]
    %v625 = vlaneseq
    %v626 = vshrl.u32 %v625, 7
    %v627 = vsub.s32 0, %v626
    %v628 = vrot.slane %v623, %v627
    %v629 = vlaneseq
    %v630 = vshrl.u32 %v629, 7
    %v631 = vsub.s32 1, %v630
    %v632 = vrot.slane %v623, %v631
    %v667 = vunpack.c.l.b16 %v590
    %v668 = vunpack.c.h.b16 %v590
    %v669 = vunpack.c.l.b16 %v591
    %v670 = vunpack.c.h.b16 %v591
    %v671 = vunpack.c.l.b16 %v592
    %v672 = vunpack.c.h.b16 %v592
    %v673 = vunpack.c.l.b16 %v593
    %v674 = vunpack.c.h.b16 %v593
    %v675 = vunpack.c.l.b16 %v594
    %v676 = vunpack.c.h.b16 %v594
    %v677 = vunpack.c.l.b16 %v595
    %v678 = vunpack.c.h.b16 %v595
    %v679 = vunpack.c.l.b16 %v596
    %v680 = vunpack.c.h.b16 %v596
    %v681 = vunpack.c.l.b16 %v597
    %v682 = vunpack.c.h.b16 %v597
    %v683 = vunpack.c.l.b16 %v598
    %v684 = vunpack.c.h.b16 %v598
    %v685 = vunpack.c.l.b16 %v599
    %v686 = vunpack.c.h.b16 %v599
    %v687 = vunpack.c.l.b16 %v600
    %v688 = vunpack.c.h.b16 %v600
    %v689 = vunpack.c.l.b16 %v601
    %v690 = vunpack.c.h.b16 %v601
    %v691 = vunpack.c.l.b16 %v602
    %v692 = vunpack.c.h.b16 %v602
    %v693 = vunpack.c.l.b16 %v603
    %v694 = vunpack.c.h.b16 %v603
    %v695 = vunpack.c.l.b16 %v604
    %v696 = vunpack.c.h.b16 %v604
    %v697 = vunpack.c.l.b16 %v605
    %v698 = vunpack.c.h.b16 %v605
    %v699 = vunpack.c.l.b16 %v606
    %v700 = vunpack.c.h.b16 %v606
    %v701 = vunpack.c.l.b16 %v607
    %v702 = vunpack.c.h.b16 %v607
    %v703 = vunpack.c.l.b16 %v608
    %v704 = vunpack.c.h.b16 %v608
    %v705 = vunpack.c.l.b16 %v609
    %v706 = vunpack.c.h.b16 %v609
    %v707 = vunpack.c.l.b16 %v610
    %v708 = vunpack.c.h.b16 %v610
    %v709 = vunpack.c.l.b16 %v611
    %v710 = vunpack.c.h.b16 %v611
    %v711 = vunpack.c.l.b16 %v612
    %v712 = vunpack.c.h.b16 %v612
    %v713 = vunpack.c.l.b16 %v613
    %v714 = vunpack.c.h.b16 %v613
    %v715 = vunpack.c.l.b16 %v614
    %v716 = vunpack.c.h.b16 %v614
    %v717 = vunpack.c.l.b16 %v615
    %v718 = vunpack.c.h.b16 %v615
    %v719 = vunpack.c.l.b16 %v616
    %v720 = vunpack.c.h.b16 %v616
    %v721 = vunpack.c.l.b16 %v617
    %v722 = vunpack.c.h.b16 %v617
    %v723 = vunpack.c.l.b16 %v618
    %v724 = vunpack.c.h.b16 %v618
    %v725 = vunpack.c.l.b16 %v619
    %v726 = vunpack.c.h.b16 %v619
    %v727 = vunpack.c.l.b16 %v620
    %v728 = vunpack.c.h.b16 %v620
    %v729 = vunpack.c.l.b16 %v621
    %v730 = vunpack.c.h.b16 %v621
    %v731 = vpack.c.b16 %v669, %v667
    %v732 = vpack.c.b16 %v670, %v668
    %v733 = vpack.c.b16 %v673, %v671
    %v734 = vpack.c.b16 %v674, %v672
    %v735 = vpack.c.b16 %v677, %v675
    %v736 = vpack.c.b16 %v678, %v676
    %v737 = vpack.c.b16 %v681, %v679
    %v738 = vpack.c.b16 %v682, %v680
    %v739 = vpack.c.b16 %v685, %v683
    %v740 = vpack.c.b16 %v686, %v684
    %v741 = vpack.c.b16 %v689, %v687
    %v742 = vpack.c.b16 %v690, %v688
    %v743 = vpack.c.b16 %v693, %v691
    %v744 = vpack.c.b16 %v694, %v692
    %v745 = vpack.c.b16 %v697, %v695
    %v746 = vpack.c.b16 %v698, %v696
    %v747 = vpack.c.b16 %v701, %v699
    %v748 = vpack.c.b16 %v702, %v700
    %v749 = vpack.c.b16 %v705, %v703
    %v750 = vpack.c.b16 %v706, %v704
    %v751 = vpack.c.b16 %v709, %v707
    %v752 = vpack.c.b16 %v710, %v708
    %v753 = vpack.c.b16 %v713, %v711
    %v754 = vpack.c.b16 %v714, %v712
    %v755 = vpack.c.b16 %v717, %v715
    %v756 = vpack.c.b16 %v718, %v716
    %v757 = vpack.c.b16 %v721, %v719
    %v758 = vpack.c.b16 %v722, %v720
    %v759 = vpack.c.b16 %v725, %v723
    %v760 = vpack.c.b16 %v726, %v724
    %v761 = vpack.c.b16 %v729, %v727
    %v762 = vpack.c.b16 %v730, %v728
    %795 = vmatprep.subr.bf16.mxu0 %v732
    %796 = vmatpush1.bf16.msra.mxu0 %v731
    %797 = vmatprep.subr.bf16.mxu0 %v734
    %798 = vmatpush1.bf16.msra.mxu0 %v733
    %799 = vmatprep.subr.bf16.mxu0 %v736
    %800 = vmatpush1.bf16.msra.mxu0 %v735
    %801 = vmatprep.subr.bf16.mxu0 %v738
    %802 = vmatpush1.bf16.msra.mxu0 %v737
    %803 = vmatprep.subr.bf16.mxu0 %v740
    %804 = vmatpush1.bf16.msra.mxu0 %v739
    %805 = vmatprep.subr.bf16.mxu0 %v742
    %806 = vmatpush1.bf16.msra.mxu0 %v741
    %807 = vmatprep.subr.bf16.mxu0 %v744
    %808 = vmatpush1.bf16.msra.mxu0 %v743
    %809 = vmatprep.subr.bf16.mxu0 %v746
    %810 = vmatpush1.bf16.msra.mxu0 %v745
    %811 = vmatprep.subr.bf16.mxu0 %v748
    %812 = vmatpush1.bf16.msra.mxu0 %v747
    %813 = vmatprep.subr.bf16.mxu0 %v750
    %814 = vmatpush1.bf16.msra.mxu0 %v749
    %815 = vmatprep.subr.bf16.mxu0 %v752
    %816 = vmatpush1.bf16.msra.mxu0 %v751
    %817 = vmatprep.subr.bf16.mxu0 %v754
    %818 = vmatpush1.bf16.msra.mxu0 %v753
    %819 = vmatprep.subr.bf16.mxu0 %v756
    %820 = vmatpush1.bf16.msra.mxu0 %v755
    %821 = vmatprep.subr.bf16.mxu0 %v758
    %822 = vmatpush1.bf16.msra.mxu0 %v757
    %823 = vmatprep.subr.bf16.mxu0 %v760
    %824 = vmatpush1.bf16.msra.mxu0 %v759
    %825 = vmatprep.subr.bf16.mxu0 %v762
    %826 = vmatpush1.bf16.msra.mxu0 %v761
    %827 = vmatprep.mubr.bf16.mxu0 %v588
    %828 = vmatmul.mubr.bf16.gmra.mrb[0].mxu0 %v587
    %v829 = vpop.f32.mrb[0].mxu0
    %v830 = vadd.f32 %v628, %v829
    %v831 = vpop.f32.mrb[0].mxu0
    %v832 = vadd.f32 %v632, %v831
    %v833 = vpop.f32.mrb[0].mxu0
    %v834 = vadd.f32 %v628, %v833
    %v835 = vpop.f32.mrb[0].mxu0
    %v836 = vadd.f32 %v632, %v835
    %837 = vdwg.mxu0
    %838 = vst [vmem:[#allocation7] sm:$0xff] %v830
    %839 = vst [vmem:[#allocation7 + $0x8] sm:$0xff] %v832
    %840 = vst [vmem:[#allocation7 + $0x10] sm:$0xff] %v834
    %841 = vst [vmem:[#allocation7 + $0x18] sm:$0xff] %v836
    // Predicated region
    $region22: #{tpu_custom_call.1} parent=1 // pred_check
      _
    $region23: #{tpu_custom_call.1} parent=1 // pred_check_branch
      %843 = sbr.rel (0) target = $region25
    $region24: #{tpu_custom_call.1} parent=1 // pred_region
      %s845 = ssub.s32 512, 512
      %846 = vsyncadd [#allocation4], %s845
      %s847 = sshll.u32 [#allocation7], 4
      %s848 = int_to_ptr.vmem [resolvable:$true] %s847
      %853 = dma.vmem_to_hbm [thread:$0]  %s848, 512, %s3, [#allocation4], 256, 256, 16
    $region25: #{tpu_custom_call.1} parent=1 // pred_fallthru
      _
    // Predicated region
    $region26: #{tpu_custom_call.1} parent=1 // pred_check
      _
    $region27: #{tpu_custom_call.1} parent=1 // pred_check_branch
      %855 = sbr.rel (0) target = $region29
    $region28: #{tpu_custom_call.1} parent=1 // pred_region
      %856 = dma.done [#allocation4], 512
    $region29: #{tpu_custom_call.1} parent=1 // pred_fallthru
      _
    %857 = vsyncpa [#allocation3], 1
    %858 = vsyncpa [#allocation6], 1
    %859 = vsyncpa [#allocation4], 1

// kernel: tpu_custom_call.1
$region0: #{tpu_custom_call.1}
  #allocation0 [shape = 'u32[]', space=smem, size = 0x4, offset = 0x4, fixed_abs, tag = 'smem constant byte address 0x4 - core index']
  #allocation1 [shape = 'u32[144,128]{1,0:T(1,128)}', space=vmem, size = 0x12000, scoped, tag = 'internal scratch']
  %s0 = inlined_call_operand.hbm [shape: f32[16,256], index: 0, kind: input, shape index: {}]
  %s1 = inlined_call_operand.hbm [shape: bf16[3,256,256], index: 1, kind: input, shape index: {}]
  %s2 = inlined_call_operand.vmem [shape: f32[3,1,256], index: 2, kind: input, shape index: {}]
  %s3 = inlined_call_operand.hbm [shape: f32[16,256], index: 3, kind: output, shape index: {}]
  %s4 = sld [smem:[#allocation0]]
  $region30: #{tpu_custom_call.1} parent=0
    _
  %s6 = ssub.s32 1, %s4
  %s7 = scalar_select 0, %s6, %s4
  $region1: #{tpu_custom_call.1} parent=0
    #allocation2 [shape = 'u8[16384]{0}', space=vmem, size = 0x4000, scoped, tag = 'input window, operand 0, single buffered']
    #allocation3 [shape = 's32[1]{0}', space=sflag, size = 0x4, scoped, tag = 'scoped memory for tpu_custom_call.1']
    #allocation4 [shape = 's32[1]{0}', space=sflag, size = 0x4, scoped, tag = 'scoped memory for tpu_custom_call.1']
    #allocation5 [shape = 'u8[393216]{0}', space=vmem, size = 0x60000, scoped, tag = 'input window, operand 1, single buffered']
    #allocation6 [shape = 's32[1]{0}', space=sflag, size = 0x4, scoped, tag = 'scoped memory for tpu_custom_call.1']
    #allocation7 [shape = 'u8[16384]{0}', space=vmem, size = 0x4000, scoped, tag = 'output window, operand 0, single buffered']
    %8 = vsyncpa [#allocation3], 0
    %9 = vsyncpa [#allocation6], 0
    %10 = vsyncpa [#allocation4], 0
    // Predicated region
    $region2: #{tpu_custom_call.1} parent=1 // pred_check
      _
    $region3: #{tpu_custom_call.1} parent=1 // pred_check_branch
      %12 = sbr.rel (0) target = $region5
    $region4: #{tpu_custom_call.1} parent=1 // pred_region
      %s14 = ssub.s32 512, 512
      %15 = vsyncadd [#allocation3], %s14
      %s16 = sshll.u32 [#allocation2], 4
      %s17 = int_to_ptr.vmem [resolvable:$true] %s16
      %22 = dma.hbm_to_vmem [thread:$0]  %s0, 512, %s17, [#allocation3], 256, 256, 16
    $region5: #{tpu_custom_call.1} parent=1 // pred_fallthru
      _
    // Predicated region
    $region6: #{tpu_custom_call.1} parent=1 // pred_check
      _
    $region7: #{tpu_custom_call.1} parent=1 // pred_check_branch
      %24 = sbr.rel (0) target = $region9
    $region8: #{tpu_custom_call.1} parent=1 // pred_region
      %s26 = ssub.s32 12288, 12288
      %27 = vsyncadd [#allocation6], %s26
      %s28 = sshll.u32 [#allocation5], 4
      %s29 = int_to_ptr.vmem [resolvable:$true] %s28
      %34 = dma.hbm_to_vmem [thread:$0]  %s1, 12288, %s29, [#allocation6], 128, 128, 8
    $region9: #{tpu_custom_call.1} parent=1 // pred_fallthru
      _
    // Predicated region
    $region10: #{tpu_custom_call.1} parent=1 // pred_check
      _
    $region11: #{tpu_custom_call.1} parent=1 // pred_check_branch
      %36 = sbr.rel (0) target = $region13
    $region12: #{tpu_custom_call.1} parent=1 // pred_region
      _
    $region13: #{tpu_custom_call.1} parent=1 // pred_fallthru
      _
    // Predicated region
    $region14: #{tpu_custom_call.1} parent=1 // pred_check
      _
    $region15: #{tpu_custom_call.1} parent=1 // pred_check_branch
      %38 = sbr.rel (0) target = $region17
    $region16: #{tpu_custom_call.1} parent=1 // pred_region
      %39 = dma.done [#allocation3], 512
    $region17: #{tpu_custom_call.1} parent=1 // pred_fallthru
      _
    // Predicated region
    $region18: #{tpu_custom_call.1} parent=1 // pred_check
      _
    $region19: #{tpu_custom_call.1} parent=1 // pred_check_branch
      %41 = sbr.rel (0) target = $region21
    $region20: #{tpu_custom_call.1} parent=1 // pred_region
      %42 = dma.done [#allocation6], 12288
    $region21: #{tpu_custom_call.1} parent=1 // pred_fallthru
      _
    %v43 = vld [vmem:[#allocation2] sm:$0xff]
    %v44 = vld [vmem:[#allocation2 + $0x8] sm:$0xff]
    %v45 = vld [vmem:[#allocation2 + $0x10] sm:$0xff]
    %v46 = vld [vmem:[#allocation2 + $0x18] sm:$0xff]
    %v47 = vpack.c.bf16 %v45, %v43
    %v48 = vpack.c.bf16 %v46, %v44
    %v49 = vld [vmem:[#allocation5] sm:$0xff]
    %v50 = vld [vmem:[#allocation5 + $0x8] sm:$0xff]
    %v51 = vld [vmem:[#allocation5 + $0x10] sm:$0xff]
    %v52 = vld [vmem:[#allocation5 + $0x18] sm:$0xff]
    %v53 = vld [vmem:[#allocation5 + $0x20] sm:$0xff]
    %v54 = vld [vmem:[#allocation5 + $0x28] sm:$0xff]
    %v55 = vld [vmem:[#allocation5 + $0x30] sm:$0xff]
    %v56 = vld [vmem:[#allocation5 + $0x38] sm:$0xff]
    %v57 = vld [vmem:[#allocation5 + $0x40] sm:$0xff]
    %v58 = vld [vmem:[#allocation5 + $0x48] sm:$0xff]
    %v59 = vld [vmem:[#allocation5 + $0x50] sm:$0xff]
    %v60 = vld [vmem:[#allocation5 + $0x58] sm:$0xff]
    %v61 = vld [vmem:[#allocation5 + $0x60] sm:$0xff]
    %v62 = vld [vmem:[#allocation5 + $0x68] sm:$0xff]
    %v63 = vld [vmem:[#allocation5 + $0x70] sm:$0xff]
    %v64 = vld [vmem:[#allocation5 + $0x78] sm:$0xff]
    %v65 = vld [vmem:[#allocation5 + $0x80] sm:$0xff]
    %v66 = vld [vmem:[#allocation5 + $0x88] sm:$0xff]
    %v67 = vld [vmem:[#allocation5 + $0x90] sm:$0xff]
    %v68 = vld [vmem:[#allocation5 + $0x98] sm:$0xff]
    %v69 = vld [vmem:[#allocation5 + $0xa0] sm:$0xff]
    %v70 = vld [vmem:[#allocation5 + $0xa8] sm:$0xff]
    %v71 = vld [vmem:[#allocation5 + $0xb0] sm:$0xff]
    %v72 = vld [vmem:[#allocation5 + $0xb8] sm:$0xff]
    %v73 = vld [vmem:[#allocation5 + $0xc0] sm:$0xff]
    %v74 = vld [vmem:[#allocation5 + $0xc8] sm:$0xff]
    %v75 = vld [vmem:[#allocation5 + $0xd0] sm:$0xff]
    %v76 = vld [vmem:[#allocation5 + $0xd8] sm:$0xff]
    %v77 = vld [vmem:[#allocation5 + $0xe0] sm:$0xff]
    %v78 = vld [vmem:[#allocation5 + $0xe8] sm:$0xff]
    %v79 = vld [vmem:[#allocation5 + $0xf0] sm:$0xff]
    %v80 = vld [vmem:[#allocation5 + $0xf8] sm:$0xff]
    %v81 = vld [vmem:[%s2] sm:$0x3]
    %v83 = vlaneseq
    %v84 = vshrl.u32 %v83, 7
    %v85 = vsub.s32 0, %v84
    %v86 = vrot.slane %v81, %v85
    %v87 = vlaneseq
    %v88 = vshrl.u32 %v87, 7
    %v89 = vsub.s32 1, %v88
    %v90 = vrot.slane %v81, %v89
    %v125 = vunpack.c.l.b16 %v49
    %v126 = vunpack.c.h.b16 %v49
    %v127 = vunpack.c.l.b16 %v50
    %v128 = vunpack.c.h.b16 %v50
    %v129 = vunpack.c.l.b16 %v51
    %v130 = vunpack.c.h.b16 %v51
    %v131 = vunpack.c.l.b16 %v52
    %v132 = vunpack.c.h.b16 %v52
    %v133 = vunpack.c.l.b16 %v53
    %v134 = vunpack.c.h.b16 %v53
    %v135 = vunpack.c.l.b16 %v54
    %v136 = vunpack.c.h.b16 %v54
    %v137 = vunpack.c.l.b16 %v55
    %v138 = vunpack.c.h.b16 %v55
    %v139 = vunpack.c.l.b16 %v56
    %v140 = vunpack.c.h.b16 %v56
    %v141 = vunpack.c.l.b16 %v57
    %v142 = vunpack.c.h.b16 %v57
    %v143 = vunpack.c.l.b16 %v58
    %v144 = vunpack.c.h.b16 %v58
    %v145 = vunpack.c.l.b16 %v59
    %v146 = vunpack.c.h.b16 %v59
    %v147 = vunpack.c.l.b16 %v60
    %v148 = vunpack.c.h.b16 %v60
    %v149 = vunpack.c.l.b16 %v61
    %v150 = vunpack.c.h.b16 %v61
    %v151 = vunpack.c.l.b16 %v62
    %v152 = vunpack.c.h.b16 %v62
    %v153 = vunpack.c.l.b16 %v63
    %v154 = vunpack.c.h.b16 %v63
    %v155 = vunpack.c.l.b16 %v64
    %v156 = vunpack.c.h.b16 %v64
    %v157 = vunpack.c.l.b16 %v65
    %v158 = vunpack.c.h.b16 %v65
    %v159 = vunpack.c.l.b16 %v66
    %v160 = vunpack.c.h.b16 %v66
    %v161 = vunpack.c.l.b16 %v67
    %v162 = vunpack.c.h.b16 %v67
    %v163 = vunpack.c.l.b16 %v68
    %v164 = vunpack.c.h.b16 %v68
    %v165 = vunpack.c.l.b16 %v69
    %v166 = vunpack.c.h.b16 %v69
    %v167 = vunpack.c.l.b16 %v70
    %v168 = vunpack.c.h.b16 %v70
    %v169 = vunpack.c.l.b16 %v71
    %v170 = vunpack.c.h.b16 %v71
    %v171 = vunpack.c.l.b16 %v72
    %v172 = vunpack.c.h.b16 %v72
    %v173 = vunpack.c.l.b16 %v73
    %v174 = vunpack.c.h.b16 %v73
    %v175 = vunpack.c.l.b16 %v74
    %v176 = vunpack.c.h.b16 %v74
    %v177 = vunpack.c.l.b16 %v75
    %v178 = vunpack.c.h.b16 %v75
    %v179 = vunpack.c.l.b16 %v76
    %v180 = vunpack.c.h.b16 %v76
    %v181 = vunpack.c.l.b16 %v77
    %v182 = vunpack.c.h.b16 %v77
    %v183 = vunpack.c.l.b16 %v78
    %v184 = vunpack.c.h.b16 %v78
    %v185 = vunpack.c.l.b16 %v79
    %v186 = vunpack.c.h.b16 %v79
    %v187 = vunpack.c.l.b16 %v80
    %v188 = vunpack.c.h.b16 %v80
    %v189 = vpack.c.b16 %v127, %v125
    %v190 = vpack.c.b16 %v128, %v126
    %v191 = vpack.c.b16 %v131, %v129
    %v192 = vpack.c.b16 %v132, %v130
    %v193 = vpack.c.b16 %v135, %v133
    %v194 = vpack.c.b16 %v136, %v134
    %v195 = vpack.c.b16 %v139, %v137
    %v196 = vpack.c.b16 %v140, %v138
    %v197 = vpack.c.b16 %v143, %v141
    %v198 = vpack.c.b16 %v144, %v142
    %v199 = vpack.c.b16 %v147, %v145
    %v200 = vpack.c.b16 %v148, %v146
    %v201 = vpack.c.b16 %v151, %v149
    %v202 = vpack.c.b16 %v152, %v150
    %v203 = vpack.c.b16 %v155, %v153
    %v204 = vpack.c.b16 %v156, %v154
    %v205 = vpack.c.b16 %v159, %v157
    %v206 = vpack.c.b16 %v160, %v158
    %v207 = vpack.c.b16 %v163, %v161
    %v208 = vpack.c.b16 %v164, %v162
    %v209 = vpack.c.b16 %v167, %v165
    %v210 = vpack.c.b16 %v168, %v166
    %v211 = vpack.c.b16 %v171, %v169
    %v212 = vpack.c.b16 %v172, %v170
    %v213 = vpack.c.b16 %v175, %v173
    %v214 = vpack.c.b16 %v176, %v174
    %v215 = vpack.c.b16 %v179, %v177
    %v216 = vpack.c.b16 %v180, %v178
    %v217 = vpack.c.b16 %v183, %v181
    %v218 = vpack.c.b16 %v184, %v182
    %v219 = vpack.c.b16 %v187, %v185
    %v220 = vpack.c.b16 %v188, %v186
    %253 = vmatprep.subr.bf16.mxu0 %v190
    %254 = vmatpush1.bf16.msra.mxu0 %v189
    %255 = vmatprep.subr.bf16.mxu0 %v192
    %256 = vmatpush1.bf16.msra.mxu0 %v191
    %257 = vmatprep.subr.bf16.mxu0 %v194
    %258 = vmatpush1.bf16.msra.mxu0 %v193
    %259 = vmatprep.subr.bf16.mxu0 %v196
    %260 = vmatpush1.bf16.msra.mxu0 %v195
    %261 = vmatprep.subr.bf16.mxu0 %v198
    %262 = vmatpush1.bf16.msra.mxu0 %v197
    %263 = vmatprep.subr.bf16.mxu0 %v200
    %264 = vmatpush1.bf16.msra.mxu0 %v199
    %265 = vmatprep.subr.bf16.mxu0 %v202
    %266 = vmatpush1.bf16.msra.mxu0 %v201
    %267 = vmatprep.subr.bf16.mxu0 %v204
    %268 = vmatpush1.bf16.msra.mxu0 %v203
    %269 = vmatprep.subr.bf16.mxu0 %v206
    %270 = vmatpush1.bf16.msra.mxu0 %v205
    %271 = vmatprep.subr.bf16.mxu0 %v208
    %272 = vmatpush1.bf16.msra.mxu0 %v207
    %273 = vmatprep.subr.bf16.mxu0 %v210
    %274 = vmatpush1.bf16.msra.mxu0 %v209
    %275 = vmatprep.subr.bf16.mxu0 %v212
    %276 = vmatpush1.bf16.msra.mxu0 %v211
    %277 = vmatprep.subr.bf16.mxu0 %v214
    %278 = vmatpush1.bf16.msra.mxu0 %v213
    %279 = vmatprep.subr.bf16.mxu0 %v216
    %280 = vmatpush1.bf16.msra.mxu0 %v215
    %281 = vmatprep.subr.bf16.mxu0 %v218
    %282 = vmatpush1.bf16.msra.mxu0 %v217
    %283 = vmatprep.subr.bf16.mxu0 %v220
    %284 = vmatpush1.bf16.msra.mxu0 %v219
    %285 = vmatprep.mubr.bf16.mxu0 %v48
    %286 = vmatmul.mubr.bf16.gmra.mrb[0].mxu0 %v47
    %v287 = vpop.f32.mrb[0].mxu0
    %v288 = vadd.f32 %v86, %v287
    %v289 = vpop.f32.mrb[0].mxu0
    %v290 = vadd.f32 %v90, %v289
    %v291 = vpop.f32.mrb[0].mxu0
    %v292 = vadd.f32 %v86, %v291
    %v293 = vpop.f32.mrb[0].mxu0
    %v294 = vadd.f32 %v90, %v293
    %295 = vdwg.mxu0
    %v296 = vmul.f32 %v288, 0.5
    %v297 = vmul.f32 %v290, 0.5
    %v298 = vmul.f32 %v292, 0.5
    %v299 = vmul.f32 %v294, 0.5
    %v300 = vmul.f32 %v288, 0.70710677
    %v301 = vmul.f32 %v290, 0.70710677
    %v302 = vmul.f32 %v292, 0.70710677
    %v303 = vmul.f32 %v294, 0.70710677
    %v304 = verf.f32.pop %v300
    %v305 = verf.f32.pop %v301
    %v306 = verf.f32.pop %v302
    %v307 = verf.f32.pop %v303
    %v308 = vadd.f32 %v304, 1.0
    %v309 = vadd.f32 %v305, 1.0
    %v310 = vadd.f32 %v306, 1.0
    %v311 = vadd.f32 %v307, 1.0
    %v312 = vmul.f32 %v296, %v308
    %v313 = vmul.f32 %v297, %v309
    %v314 = vmul.f32 %v298, %v310
    %v315 = vmul.f32 %v299, %v311
    %v316 = vpack.c.bf16 %v314, %v312
    %v317 = vpack.c.bf16 %v315, %v313
    %s318 = scalar_lea.vmem [#allocation5], 256
    %v319 = vld [vmem:[%s318] sm:$0xff]
    %v320 = vld [vmem:[%s318 + $0x8] sm:$0xff]
    %v321 = vld [vmem:[%s318 + $0x10] sm:$0xff]
    %v322 = vld [vmem:[%s318 + $0x18] sm:$0xff]
    %v323 = vld [vmem:[%s318 + $0x20] sm:$0xff]
    %v324 = vld [vmem:[%s318 + $0x28] sm:$0xff]
    %v325 = vld [vmem:[%s318 + $0x30] sm:$0xff]
    %v326 = vld [vmem:[%s318 + $0x38] sm:$0xff]
    %v327 = vld [vmem:[%s318 + $0x40] sm:$0xff]
    %v328 = vld [vmem:[%s318 + $0x48] sm:$0xff]
    %v329 = vld [vmem:[%s318 + $0x50] sm:$0xff]
    %v330 = vld [vmem:[%s318 + $0x58] sm:$0xff]
    %v331 = vld [vmem:[%s318 + $0x60] sm:$0xff]
    %v332 = vld [vmem:[%s318 + $0x68] sm:$0xff]
    %v333 = vld [vmem:[%s318 + $0x70] sm:$0xff]
    %v334 = vld [vmem:[%s318 + $0x78] sm:$0xff]
    %v335 = vld [vmem:[%s318 + $0x80] sm:$0xff]
    %v336 = vld [vmem:[%s318 + $0x88] sm:$0xff]
    %v337 = vld [vmem:[%s318 + $0x90] sm:$0xff]
    %v338 = vld [vmem:[%s318 + $0x98] sm:$0xff]
    %v339 = vld [vmem:[%s318 + $0xa0] sm:$0xff]
    %v340 = vld [vmem:[%s318 + $0xa8] sm:$0xff]
    %v341 = vld [vmem:[%s318 + $0xb0] sm:$0xff]
    %v342 = vld [vmem:[%s318 + $0xb8] sm:$0xff]
    %v343 = vld [vmem:[%s318 + $0xc0] sm:$0xff]
    %v344 = vld [vmem:[%s318 + $0xc8] sm:$0xff]
    %v345 = vld [vmem:[%s318 + $0xd0] sm:$0xff]
    %v346 = vld [vmem:[%s318 + $0xd8] sm:$0xff]
    %v347 = vld [vmem:[%s318 + $0xe0] sm:$0xff]
    %v348 = vld [vmem:[%s318 + $0xe8] sm:$0xff]
    %v349 = vld [vmem:[%s318 + $0xf0] sm:$0xff]
    %v350 = vld [vmem:[%s318 + $0xf8] sm:$0xff]
    %s351 = scalar_lea.vmem %s2, 2
    %v352 = vld [vmem:[%s351] sm:$0x3]
    %v354 = vlaneseq
    %v355 = vshrl.u32 %v354, 7
    %v356 = vsub.s32 0, %v355
    %v357 = vrot.slane %v352, %v356
    %v358 = vlaneseq
    %v359 = vshrl.u32 %v358, 7
    %v360 = vsub.s32 1, %v359
    %v361 = vrot.slane %v352, %v360
    %v396 = vunpack.c.l.b16 %v319
    %v397 = vunpack.c.h.b16 %v319
    %v398 = vunpack.c.l.b16 %v320
    %v399 = vunpack.c.h.b16 %v320
    %v400 = vunpack.c.l.b16 %v321
    %v401 = vunpack.c.h.b16 %v321
    %v402 = vunpack.c.l.b16 %v322
    %v403 = vunpack.c.h.b16 %v322
    %v404 = vunpack.c.l.b16 %v323
    %v405 = vunpack.c.h.b16 %v323
    %v406 = vunpack.c.l.b16 %v324
    %v407 = vunpack.c.h.b16 %v324
    %v408 = vunpack.c.l.b16 %v325
    %v409 = vunpack.c.h.b16 %v325
    %v410 = vunpack.c.l.b16 %v326
    %v411 = vunpack.c.h.b16 %v326
    %v412 = vunpack.c.l.b16 %v327
    %v413 = vunpack.c.h.b16 %v327
    %v414 = vunpack.c.l.b16 %v328
    %v415 = vunpack.c.h.b16 %v328
    %v416 = vunpack.c.l.b16 %v329
    %v417 = vunpack.c.h.b16 %v329
    %v418 = vunpack.c.l.b16 %v330
    %v419 = vunpack.c.h.b16 %v330
    %v420 = vunpack.c.l.b16 %v331
    %v421 = vunpack.c.h.b16 %v331
    %v422 = vunpack.c.l.b16 %v332
    %v423 = vunpack.c.h.b16 %v332
    %v424 = vunpack.c.l.b16 %v333
    %v425 = vunpack.c.h.b16 %v333
    %v426 = vunpack.c.l.b16 %v334
    %v427 = vunpack.c.h.b16 %v334
    %v428 = vunpack.c.l.b16 %v335
    %v429 = vunpack.c.h.b16 %v335
    %v430 = vunpack.c.l.b16 %v336
    %v431 = vunpack.c.h.b16 %v336
    %v432 = vunpack.c.l.b16 %v337
    %v433 = vunpack.c.h.b16 %v337
    %v434 = vunpack.c.l.b16 %v338
    %v435 = vunpack.c.h.b16 %v338
    %v436 = vunpack.c.l.b16 %v339
    %v437 = vunpack.c.h.b16 %v339
    %v438 = vunpack.c.l.b16 %v340
    %v439 = vunpack.c.h.b16 %v340
    %v440 = vunpack.c.l.b16 %v341
    %v441 = vunpack.c.h.b16 %v341
    %v442 = vunpack.c.l.b16 %v342
    %v443 = vunpack.c.h.b16 %v342
    %v444 = vunpack.c.l.b16 %v343
    %v445 = vunpack.c.h.b16 %v343
    %v446 = vunpack.c.l.b16 %v344
    %v447 = vunpack.c.h.b16 %v344
    %v448 = vunpack.c.l.b16 %v345
    %v449 = vunpack.c.h.b16 %v345
    %v450 = vunpack.c.l.b16 %v346
    %v451 = vunpack.c.h.b16 %v346
    %v452 = vunpack.c.l.b16 %v347
    %v453 = vunpack.c.h.b16 %v347
    %v454 = vunpack.c.l.b16 %v348
    %v455 = vunpack.c.h.b16 %v348
    %v456 = vunpack.c.l.b16 %v349
    %v457 = vunpack.c.h.b16 %v349
    %v458 = vunpack.c.l.b16 %v350
    %v459 = vunpack.c.h.b16 %v350
    %v460 = vpack.c.b16 %v398, %v396
    %v461 = vpack.c.b16 %v399, %v397
    %v462 = vpack.c.b16 %v402, %v400
    %v463 = vpack.c.b16 %v403, %v401
    %v464 = vpack.c.b16 %v406, %v404
    %v465 = vpack.c.b16 %v407, %v405
    %v466 = vpack.c.b16 %v410, %v408
    %v467 = vpack.c.b16 %v411, %v409
    %v468 = vpack.c.b16 %v414, %v412
    %v469 = vpack.c.b16 %v415, %v413
    %v470 = vpack.c.b16 %v418, %v416
    %v471 = vpack.c.b16 %v419, %v417
    %v472 = vpack.c.b16 %v422, %v420
    %v473 = vpack.c.b16 %v423, %v421
    %v474 = vpack.c.b16 %v426, %v424
    %v475 = vpack.c.b16 %v427, %v425
    %v476 = vpack.c.b16 %v430, %v428
    %v477 = vpack.c.b16 %v431, %v429
    %v478 = vpack.c.b16 %v434, %v432
    %v479 = vpack.c.b16 %v435, %v433
    %v480 = vpack.c.b16 %v438, %v436
    %v481 = vpack.c.b16 %v439, %v437
    %v482 = vpack.c.b16 %v442, %v440
    %v483 = vpack.c.b16 %v443, %v441
    %v484 = vpack.c.b16 %v446, %v444
    %v485 = vpack.c.b16 %v447, %v445
    %v486 = vpack.c.b16 %v450, %v448
    %v487 = vpack.c.b16 %v451, %v449
    %v488 = vpack.c.b16 %v454, %v452
    %v489 = vpack.c.b16 %v455, %v453
    %v490 = vpack.c.b16 %v458, %v456
    %v491 = vpack.c.b16 %v459, %v457
    %524 = vmatprep.subr.bf16.mxu0 %v461
    %525 = vmatpush1.bf16.msra.mxu0 %v460
    %526 = vmatprep.subr.bf16.mxu0 %v463
    %527 = vmatpush1.bf16.msra.mxu0 %v462
    %528 = vmatprep.subr.bf16.mxu0 %v465
    %529 = vmatpush1.bf16.msra.mxu0 %v464
    %530 = vmatprep.subr.bf16.mxu0 %v467
    %531 = vmatpush1.bf16.msra.mxu0 %v466
    %532 = vmatprep.subr.bf16.mxu0 %v469
    %533 = vmatpush1.bf16.msra.mxu0 %v468
    %534 = vmatprep.subr.bf16.mxu0 %v471
    %535 = vmatpush1.bf16.msra.mxu0 %v470
    %536 = vmatprep.subr.bf16.mxu0 %v473
    %537 = vmatpush1.bf16.msra.mxu0 %v472
    %538 = vmatprep.subr.bf16.mxu0 %v475
    %539 = vmatpush1.bf16.msra.mxu0 %v474
    %540 = vmatprep.subr.bf16.mxu0 %v477
    %541 = vmatpush1.bf16.msra.mxu0 %v476
    %542 = vmatprep.subr.bf16.mxu0 %v479
    %543 = vmatpush1.bf16.msra.mxu0 %v478
    %544 = vmatprep.subr.bf16.mxu0 %v481
    %545 = vmatpush1.bf16.msra.mxu0 %v480
    %546 = vmatprep.subr.bf16.mxu0 %v483
    %547 = vmatpush1.bf16.msra.mxu0 %v482
    %548 = vmatprep.subr.bf16.mxu0 %v485
    %549 = vmatpush1.bf16.msra.mxu0 %v484
    %550 = vmatprep.subr.bf16.mxu0 %v487
    %551 = vmatpush1.bf16.msra.mxu0 %v486
    %552 = vmatprep.subr.bf16.mxu0 %v489
    %553 = vmatpush1.bf16.msra.mxu0 %v488
    %554 = vmatprep.subr.bf16.mxu0 %v491
    %555 = vmatpush1.bf16.msra.mxu0 %v490
    %556 = vmatprep.mubr.bf16.mxu0 %v317
    %557 = vmatmul.mubr.bf16.gmra.mrb[0].mxu0 %v316
    %v558 = vpop.f32.mrb[0].mxu0
    %v559 = vadd.f32 %v357, %v558
    %v560 = vpop.f32.mrb[0].mxu0
    %v561 = vadd.f32 %v361, %v560
    %v562 = vpop.f32.mrb[0].mxu0
    %v563 = vadd.f32 %v357, %v562
    %v564 = vpop.f32.mrb[0].mxu0
    %v565 = vadd.f32 %v361, %v564
    %566 = vdwg.mxu0
    %v567 = vmul.f32 %v559, 0.5
    %v568 = vmul.f32 %v561, 0.5
    %v569 = vmul.f32 %v563, 0.5
    %v570 = vmul.f32 %v565, 0.5
    %v571 = vmul.f32 %v559, 0.70710677
    %v572 = vmul.f32 %v561, 0.70710677
    %v573 = vmul.f32 %v563, 0.70710677
    %v574 = vmul.f32 %v565, 0.70710677
    %v575 = verf.f32.pop %v571
    %v576 = verf.f32.pop %v572
    %v577 = verf.f32.pop %v573
    %v578 = verf.f32.pop %v574
    %v579 = vadd.f32 %v575, 1.0
    %v580 = vadd.f32 %v576, 1.0
    %v581 = vadd.f32 %v577, 1.0
    %v582 = vadd.f32 %v578, 1.0
    %v583 = vmul.f32 %v567, %v579
    %v584 = vmul.f32 %v568, %v580
    %v585 = vmul.f32 %v569, %v581
    %v586 = vmul.f32 %v570, %v582
    %v587 = vpack.c.bf16 %v585, %v583
    %v588 = vpack.c.bf16 %v586, %v584
    %s589 = scalar_lea.vmem [#allocation5], 512
    %v590 = vld [vmem:[%s589] sm:$0xff]
    %v591 = vld [vmem:[%s589 + $0x8] sm:$0xff]
    %v592 = vld [vmem:[%s589 + $0x10] sm:$0xff]
    %v593 = vld [vmem:[%s589 + $0x18] sm:$0xff]
    %v594 = vld [vmem:[%s589 + $0x20] sm:$0xff]
    %v595 = vld [vmem:[%s589 + $0x28] sm:$0xff]
    %v596 = vld [vmem:[%s589 + $0x30] sm:$0xff]
    %v597 = vld [vmem:[%s589 + $0x38] sm:$0xff]
    %v598 = vld [vmem:[%s589 + $0x40] sm:$0xff]
    %v599 = vld [vmem:[%s589 + $0x48] sm:$0xff]
    %v600 = vld [vmem:[%s589 + $0x50] sm:$0xff]
    %v601 = vld [vmem:[%s589 + $0x58] sm:$0xff]
    %v602 = vld [vmem:[%s589 + $0x60] sm:$0xff]
    %v603 = vld [vmem:[%s589 + $0x68] sm:$0xff]
    %v604 = vld [vmem:[%s589 + $0x70] sm:$0xff]
    %v605 = vld [vmem:[%s589 + $0x78] sm:$0xff]
    %v606 = vld [vmem:[%s589 + $0x80] sm:$0xff]
    %v607 = vld [vmem:[%s589 + $0x88] sm:$0xff]
    %v608 = vld [vmem:[%s589 + $0x90] sm:$0xff]
    %v609 = vld [vmem:[%s589 + $0x98] sm:$0xff]
    %v610 = vld [vmem:[%s589 + $0xa0] sm:$0xff]
    %v611 = vld [vmem:[%s589 + $0xa8] sm:$0xff]
    %v612 = vld [vmem:[%s589 + $0xb0] sm:$0xff]
    %v613 = vld [vmem:[%s589 + $0xb8] sm:$0xff]
    %v614 = vld [vmem:[%s589 + $0xc0] sm:$0xff]
    %v615 = vld [vmem:[%s589 + $0xc8] sm:$0xff]
    %v616 = vld [vmem:[%s589 + $0xd0] sm:$0xff]
    %v617 = vld [vmem:[%s589 + $0xd8] sm:$0xff]
    %v618 = vld [vmem:[%s589 + $0xe0] sm:$0xff]
    %v619 = vld [vmem:[%s589 + $0xe8] sm:$0xff]
    %v620 = vld [vmem:[%s589 + $0xf0] sm:$0xff]
    %v621 = vld [vmem:[%s589 + $0xf8] sm:$0xff]
    %s622 = scalar_lea.vmem %s2, 4
    %v623 = vld [vmem:[%s622] sm:$0x3]
    %v625 = vlaneseq
    %v626 = vshrl.u32 %v625, 7
    %v627 = vsub.s32 0, %v626
    %v628 = vrot.slane %v623, %v627
    %v629 = vlaneseq
    %v630 = vshrl.u32 %v629, 7
    %v631 = vsub.s32 1, %v630
    %v632 = vrot.slane %v623, %v631
    %v667 = vunpack.c.l.b16 %v590
    %v668 = vunpack.c.h.b16 %v590
    %v669 = vunpack.c.l.b16 %v591
    %v670 = vunpack.c.h.b16 %v591
    %v671 = vunpack.c.l.b16 %v592
    %v672 = vunpack.c.h.b16 %v592
    %v673 = vunpack.c.l.b16 %v593
    %v674 = vunpack.c.h.b16 %v593
    %v675 = vunpack.c.l.b16 %v594
    %v676 = vunpack.c.h.b16 %v594
    %v677 = vunpack.c.l.b16 %v595
    %v678 = vunpack.c.h.b16 %v595
    %v679 = vunpack.c.l.b16 %v596
    %v680 = vunpack.c.h.b16 %v596
    %v681 = vunpack.c.l.b16 %v597
    %v682 = vunpack.c.h.b16 %v597
    %v683 = vunpack.c.l.b16 %v598
    %v684 = vunpack.c.h.b16 %v598
    %v685 = vunpack.c.l.b16 %v599
    %v686 = vunpack.c.h.b16 %v599
    %v687 = vunpack.c.l.b16 %v600
    %v688 = vunpack.c.h.b16 %v600
    %v689 = vunpack.c.l.b16 %v601
    %v690 = vunpack.c.h.b16 %v601
    %v691 = vunpack.c.l.b16 %v602
    %v692 = vunpack.c.h.b16 %v602
    %v693 = vunpack.c.l.b16 %v603
    %v694 = vunpack.c.h.b16 %v603
    %v695 = vunpack.c.l.b16 %v604
    %v696 = vunpack.c.h.b16 %v604
    %v697 = vunpack.c.l.b16 %v605
    %v698 = vunpack.c.h.b16 %v605
    %v699 = vunpack.c.l.b16 %v606
    %v700 = vunpack.c.h.b16 %v606
    %v701 = vunpack.c.l.b16 %v607
    %v702 = vunpack.c.h.b16 %v607
    %v703 = vunpack.c.l.b16 %v608
    %v704 = vunpack.c.h.b16 %v608
    %v705 = vunpack.c.l.b16 %v609
    %v706 = vunpack.c.h.b16 %v609
    %v707 = vunpack.c.l.b16 %v610
    %v708 = vunpack.c.h.b16 %v610
    %v709 = vunpack.c.l.b16 %v611
    %v710 = vunpack.c.h.b16 %v611
    %v711 = vunpack.c.l.b16 %v612
    %v712 = vunpack.c.h.b16 %v612
    %v713 = vunpack.c.l.b16 %v613
    %v714 = vunpack.c.h.b16 %v613
    %v715 = vunpack.c.l.b16 %v614
    %v716 = vunpack.c.h.b16 %v614
    %v717 = vunpack.c.l.b16 %v615
    %v718 = vunpack.c.h.b16 %v615
    %v719 = vunpack.c.l.b16 %v616
    %v720 = vunpack.c.h.b16 %v616
    %v721 = vunpack.c.l.b16 %v617
    %v722 = vunpack.c.h.b16 %v617
    %v723 = vunpack.c.l.b16 %v618
    %v724 = vunpack.c.h.b16 %v618
    %v725 = vunpack.c.l.b16 %v619
    %v726 = vunpack.c.h.b16 %v619
    %v727 = vunpack.c.l.b16 %v620
    %v728 = vunpack.c.h.b16 %v620
    %v729 = vunpack.c.l.b16 %v621
    %v730 = vunpack.c.h.b16 %v621
    %v731 = vpack.c.b16 %v669, %v667
    %v732 = vpack.c.b16 %v670, %v668
    %v733 = vpack.c.b16 %v673, %v671
    %v734 = vpack.c.b16 %v674, %v672
    %v735 = vpack.c.b16 %v677, %v675
    %v736 = vpack.c.b16 %v678, %v676
    %v737 = vpack.c.b16 %v681, %v679
    %v738 = vpack.c.b16 %v682, %v680
    %v739 = vpack.c.b16 %v685, %v683
    %v740 = vpack.c.b16 %v686, %v684
    %v741 = vpack.c.b16 %v689, %v687
    %v742 = vpack.c.b16 %v690, %v688
    %v743 = vpack.c.b16 %v693, %v691
    %v744 = vpack.c.b16 %v694, %v692
    %v745 = vpack.c.b16 %v697, %v695
    %v746 = vpack.c.b16 %v698, %v696
    %v747 = vpack.c.b16 %v701, %v699
    %v748 = vpack.c.b16 %v702, %v700
    %v749 = vpack.c.b16 %v705, %v703
    %v750 = vpack.c.b16 %v706, %v704
    %v751 = vpack.c.b16 %v709, %v707
    %v752 = vpack.c.b16 %v710, %v708
    %v753 = vpack.c.b16 %v713, %v711
    %v754 = vpack.c.b16 %v714, %v712
    %v755 = vpack.c.b16 %v717, %v715
    %v756 = vpack.c.b16 %v718, %v716
    %v757 = vpack.c.b16 %v721, %v719
    %v758 = vpack.c.b16 %v722, %v720
    %v759 = vpack.c.b16 %v725, %v723
    %v760 = vpack.c.b16 %v726, %v724
    %v761 = vpack.c.b16 %v729, %v727
    %v762 = vpack.c.b16 %v730, %v728
    %795 = vmatprep.subr.bf16.mxu0 %v732
    %796 = vmatpush1.bf16.msra.mxu0 %v731
    %797 = vmatprep.subr.bf16.mxu0 %v734
    %798 = vmatpush1.bf16.msra.mxu0 %v733
    %799 = vmatprep.subr.bf16.mxu0 %v736
    %800 = vmatpush1.bf16.msra.mxu0 %v735
    %801 = vmatprep.subr.bf16.mxu0 %v738
    %802 = vmatpush1.bf16.msra.mxu0 %v737
    %803 = vmatprep.subr.bf16.mxu0 %v740
    %804 = vmatpush1.bf16.msra.mxu0 %v739
    %805 = vmatprep.subr.bf16.mxu0 %v742
    %806 = vmatpush1.bf16.msra.mxu0 %v741
    %807 = vmatprep.subr.bf16.mxu0 %v744
    %808 = vmatpush1.bf16.msra.mxu0 %v743
    %809 = vmatprep.subr.bf16.mxu0 %v746
    %810 = vmatpush1.bf16.msra.mxu0 %v745
    %811 = vmatprep.subr.bf16.mxu0 %v748
    %812 = vmatpush1.bf16.msra.mxu0 %v747
    %813 = vmatprep.subr.bf16.mxu0 %v750
    %814 = vmatpush1.bf16.msra.mxu0 %v749
    %815 = vmatprep.subr.bf16.mxu0 %v752
    %816 = vmatpush1.bf16.msra.mxu0 %v751
    %817 = vmatprep.subr.bf16.mxu0 %v754
    %818 = vmatpush1.bf16.msra.mxu0 %v753
    %819 = vmatprep.subr.bf16.mxu0 %v756
    %820 = vmatpush1.bf16.msra.mxu0 %v755
    %821 = vmatprep.subr.bf16.mxu0 %v758
    %822 = vmatpush1.bf16.msra.mxu0 %v757
    %823 = vmatprep.subr.bf16.mxu0 %v760
    %824 = vmatpush1.bf16.msra.mxu0 %v759
    %825 = vmatprep.subr.bf16.mxu0 %v762
    %826 = vmatpush1.bf16.msra.mxu0 %v761
    %827 = vmatprep.mubr.bf16.mxu0 %v588
    %828 = vmatmul.mubr.bf16.gmra.mrb[0].mxu0 %v587
    %v829 = vpop.f32.mrb[0].mxu0
    %v830 = vadd.f32 %v628, %v829
    %v831 = vpop.f32.mrb[0].mxu0
    %v832 = vadd.f32 %v632, %v831
    %v833 = vpop.f32.mrb[0].mxu0
    %v834 = vadd.f32 %v628, %v833
    %v835 = vpop.f32.mrb[0].mxu0
    %v836 = vadd.f32 %v632, %v835
    %837 = vdwg.mxu0
    %838 = vst [vmem:[#allocation7] sm:$0xff] %v830
    %839 = vst [vmem:[#allocation7 + $0x8] sm:$0xff] %v832
    %840 = vst [vmem:[#allocation7 + $0x10] sm:$0xff] %v834
    %841 = vst [vmem:[#allocation7 + $0x18] sm:$0xff] %v836
    // Predicated region
    $region22: #{tpu_custom_call.1} parent=1 // pred_check
      _
    $region23: #{tpu_custom_call.1} parent=1 // pred_check_branch
      %843 = sbr.rel (0) target = $region25
    $region24: #{tpu_custom_call.1} parent=1 // pred_region
      %s845 = ssub.s32 512, 512
      %846 = vsyncadd [#allocation4], %s845
      %s847 = sshll.u32 [#allocation7], 4
      %s848 = int_to_ptr.vmem [resolvable:$true] %s847
      %853 = dma.vmem_to_hbm [thread:$0]  %s848, 512, %s3, [#allocation4], 256, 256, 16
    $region25: #{tpu_custom_call.1} parent=1 // pred_fallthru
      _
    // Predicated region
    $region26: #{tpu_custom_call.1} parent=1 // pred_check
      _
    $region27: #{tpu_custom_call.1} parent=1 // pred_check_branch
      %855 = sbr.rel (0) target = $region29
    $region28: #{tpu_custom_call.1} parent=1 // pred_region
      %856 = dma.done [#allocation4], 512
    $region29: #{tpu_custom_call.1} parent=1 // pred_fallthru
      _
    %857 = vsyncpa [#allocation3], 1
    %858 = vsyncpa [#allocation6], 1
    %859 = vsyncpa [#allocation4], 1

</llo_original>
